<compile_context>
chip_gen: v7x
topology: tpu7x:2x2x1
jax: 0.10.0
libtpu: 0.0.40
codegen_flags: <defaults>
</compile_context>

<pallas_src>
import jax
import jax.numpy as jnp
from jax import lax
from jax.experimental import pallas as pl
from jax.experimental.pallas import tpu as pltpu

# Set to jnp.bfloat16 on v6e/v7x for higher MXU throughput (loosen the test
# tolerance in __main__ accordingly).  f32 keeps bit-level headroom vs. torch.
MATMUL_DTYPE = jnp.float32


# ----------------------------------------------------------------------------
# Fused forward kernel (one batch tile per grid step)
# ----------------------------------------------------------------------------
def _mnist_cnn_kernel(x_ref, r1_ref, b1_ref, r2_ref, b2_ref,
                      wf1_ref, bf1_ref, wf2_ref, bf2_ref, wf3_ref, bf3_ref,
                      out_ref, h1_ref, p1_ref, h2_ref, p2_ref):
    f32 = jnp.float32
    bt = x_ref.shape[0]                       # images in this batch tile

    # ---- conv1: 5 Toeplitz matmuls; even/odd output columns (W-pool) are the
    #      two 128-lane halves of the 256-wide RHS --------------------------
    acc1 = jnp.zeros((bt * 24, 256), f32)
    for dh in range(5):                       # kernel row (static unroll)
        a = x_ref[:, dh:dh + 24, :].reshape(bt * 24, 28).astype(MATMUL_DTYPE)
        acc1 = acc1 + jnp.dot(a, r1_ref[dh], preferred_element_type=f32)
    # max over the W direction of each 2x2 pooling window
    h1_ref[...] = jnp.maximum(acc1[:, :128], acc1[:, 128:]).reshape(bt, 24, 128)

    # max over the H direction (strided VMEM reads pair rows 2i / 2i+1),
    # then bias + ReLU (both commute with the max)
    p1 = jnp.maximum(h1_ref[:, pl.ds(0, 12, 2), :],
                     h1_ref[:, pl.ds(1, 12, 2), :])          # (bt, 12, 128)
    p1_ref[...] = jnp.maximum(p1 + b1_ref[...], 0.0)

    # ---- conv2: same scheme, K = 128 (12 pooled cols x 10 ch, zero padded) --
    acc2 = jnp.zeros((bt * 8, 256), f32)
    for dh in range(5):
        a2 = p1_ref[:, dh:dh + 8, :].reshape(bt * 8, 128).astype(MATMUL_DTYPE)
        acc2 = acc2 + jnp.dot(a2, r2_ref[dh], preferred_element_type=f32)
    h2_ref[...] = jnp.maximum(acc2[:, :128], acc2[:, 128:]).reshape(bt, 8, 128)

    p2 = jnp.maximum(h2_ref[:, pl.ds(0, 4, 2), :],
                     h2_ref[:, pl.ds(1, 4, 2), :])           # (bt, 4, 128)
    p2_ref[...] = jnp.maximum(p2 + b2_ref[...], 0.0)

    # ---- fc1 (flatten folded into 4 row-blocks of the pooled map) ----------
    acc = jnp.zeros((bt, 128), f32)
    for i in range(4):                        # pooled H position
        acc = acc + jnp.dot(p2_ref[:, i, :].astype(MATMUL_DTYPE), wf1_ref[i],
                            preferred_element_type=f32)
    h = jnp.maximum(acc + bf1_ref[...], 0.0)                 # (bt, 128), fc1+ReLU

    # ---- fc2 -> ReLU -> fc3 (all N padded to 128 lanes) --------------------
    h = jnp.maximum(jnp.dot(h.astype(MATMUL_DTYPE), wf2_ref[...],
                            preferred_element_type=f32) + bf2_ref[...], 0.0)
    out = jnp.dot(h.astype(MATMUL_DTYPE), wf3_ref[...],
                  preferred_element_type=f32) + bf3_ref[...]
    out_ref[...] = out.astype(out_ref.dtype)                 # (bt, 128) lane-dense


# ----------------------------------------------------------------------------
# Parameter preparation (tiny XLA ops; in a real pipeline do this once)
# ----------------------------------------------------------------------------
def _prepare_params(params):
    f32 = jnp.float32
    dt = MATMUL_DTYPE

    def padb(b, n=128):
        return jnp.pad(b.astype(f32), (0, n - b.shape[0])).reshape(1, n)

    # conv1 -> Toeplitz RHS r1: (5, 28, 256).
    # r1[dh, w, j*10+c]       = W1[c, 0, dh, w-2j]   (even pooled column)
    # r1[dh, w, 128+j*10+c]   = W1[c, 0, dh, w-2j-1] (odd pooled column)
    w1 = params["conv1_w"][:, 0].astype(f32)                 # (10, 5, 5)
    dw = jnp.arange(28)[:, None] - jnp.arange(24)[None, :]   # (28, 24) = w - ow
    valid = (dw >= 0) & (dw < 5)
    g = w1[:, :, jnp.clip(dw, 0, 4)]                         # (10, 5, 28, 24)
    g = jnp.where(valid[None, None], g, 0.0)
    g = g.transpose(1, 2, 3, 0)                              # (dh, w, ow, c)
    ev = g[:, :, 0::2, :].reshape(5, 28, 120)
    od = g[:, :, 1::2, :].reshape(5, 28, 120)
    z8 = jnp.zeros((5, 28, 8), f32)
    r1 = jnp.concatenate([ev, z8, od, z8], axis=-1).astype(dt)   # (5, 28, 256)
    b1 = padb(jnp.tile(params["conv1_b"].astype(f32), 12))       # bias per (j, c)

    # conv2 -> Toeplitz RHS r2: (5, 128, 256); rows = (w_in, ci), cols as above
    w2 = params["conv2_w"].astype(f32)                       # (20, 10, 5, 5)
    dw2 = jnp.arange(12)[:, None] - jnp.arange(8)[None, :]   # (12, 8)
    valid2 = (dw2 >= 0) & (dw2 < 5)
    g2 = w2[:, :, :, jnp.clip(dw2, 0, 4)]                    # (20, 10, 5, 12, 8)
    g2 = jnp.where(valid2[None, None, None], g2, 0.0)
    g2 = g2.transpose(2, 3, 1, 4, 0).reshape(5, 120, 8, 20)  # (dh, w_in*ci, ow, co)
    ev2 = g2[:, :, 0::2, :].reshape(5, 120, 80)
    od2 = g2[:, :, 1::2, :].reshape(5, 120, 80)
    z48 = jnp.zeros((5, 120, 48), f32)
    r2 = jnp.concatenate([ev2, z48, od2, z48], axis=-1)      # (5, 120, 256)
    r2 = jnp.pad(r2, ((0, 0), (0, 8), (0, 0))).astype(dt)    # (5, 128, 256)
    b2 = padb(jnp.tile(params["conv2_b"].astype(f32), 4))

    # fc1: torch.flatten(NCHW) column order (c, h, w) -> our rows (h | w*20+c)
    wf1 = params["fc1_w"].astype(f32).reshape(120, 20, 4, 4)
    wf1 = wf1.transpose(2, 3, 1, 0).reshape(4, 80, 120)      # (h, w*20+c, n)
    wf1 = jnp.pad(wf1, ((0, 0), (0, 48), (0, 8))).astype(dt)  # (4, 128, 128)
    bf1 = padb(params["fc1_b"])

    wf2 = jnp.pad(params["fc2_w"].astype(f32).T, ((0, 8), (0, 44))).astype(dt)
    bf2 = padb(params["fc2_b"])
    wf3 = jnp.pad(params["fc3_w"].astype(f32).T, ((0, 44), (0, 118))).astype(dt)
    bf3 = padb(params["fc3_b"])

    return r1, b1, r2, b2, wf1, bf1, wf2, bf2, wf3, bf3


# ----------------------------------------------------------------------------
# Forward pass
# ----------------------------------------------------------------------------
def mnist_cnn_forward(x, params):
    # x: NCHW (B, 1, 28, 28) float32 (same as the PyTorch module)
    B = x.shape[0]
    assert x.shape[1:] == (1, 28, 28)
    x3 = x.reshape(B, 28, 28).astype(jnp.float32)

    # Batch tiling: 8 images / grid step (sublane-aligned output blocks);
    # tiny batches run as a single full block.  Padded rows are discarded.
    bt = B if B <= 8 else 8
    b_pad = bt * pl.cdiv(B, bt)
    if b_pad != B:
        x3 = jnp.pad(x3, ((0, b_pad - B), (0, 0), (0, 0)))

    r1, b1, r2, b2, wf1, bf1, wf2, bf2, wf3, bf3 = _prepare_params(params)

    const3 = lambda i: (0, 0, 0)
    const2 = lambda i: (0, 0)
    out = pl.pallas_call(
        _mnist_cnn_kernel,
        out_shape=jax.ShapeDtypeStruct((b_pad, 128), jnp.float32),
        grid_spec=pltpu.PrefetchScalarGridSpec(
            num_scalar_prefetch=0,
            grid=(b_pad // bt,),
            in_specs=[
                pl.BlockSpec((bt, 28, 28), lambda i: (i, 0, 0)),   # x tile
                pl.BlockSpec((5, 28, 256), const3),                # conv1 RHS
                pl.BlockSpec((1, 128), const2),                    # conv1 bias
                pl.BlockSpec((5, 128, 256), const3),               # conv2 RHS
                pl.BlockSpec((1, 128), const2),                    # conv2 bias
                pl.BlockSpec((4, 128, 128), const3),               # fc1 W blocks
                pl.BlockSpec((1, 128), const2),                    # fc1 bias
                pl.BlockSpec((128, 128), const2),                  # fc2 W
                pl.BlockSpec((1, 128), const2),                    # fc2 bias
                pl.BlockSpec((128, 128), const2),                  # fc3 W
                pl.BlockSpec((1, 128), const2),                    # fc3 bias
            ],
            out_specs=pl.BlockSpec((bt, 128), lambda i: (i, 0)),
            scratch_shapes=[
                pltpu.VMEM((bt, 24, 128), jnp.float32),  # conv1, W-pooled
                pltpu.VMEM((bt, 12, 128), jnp.float32),  # pooled1 (post ReLU)
                pltpu.VMEM((bt, 8, 128), jnp.float32),   # conv2, W-pooled
                pltpu.VMEM((bt, 4, 128), jnp.float32),   # pooled2 (post ReLU)
            ],
        ),
        compiler_params=pltpu.CompilerParams(
            dimension_semantics=("parallel",)),
    )(x3, r1, b1, r2, b2, wf1, bf1, wf2, bf2, wf3, bf3)

    return out[:B, :10]                                      # un-pad batch and lanes


# ----------------------------------------------------------------------------
# Pure-JAX reference (for correctness check only)
# ----------------------------------------------------------------------------
def reference_forward(x, params):
    def conv(x, w, b):
        y = lax.conv_general_dilated(x, w, (1, 1), "VALID",
                                     dimension_numbers=("NCHW", "OIHW", "NCHW"))
        return y + b.reshape(1, -1, 1, 1)

    def pool(y):
        B, C, H, W = y.shape
        return y.reshape(B, C, H // 2, 2, W // 2, 2).max(axis=(3, 5))

    y = pool(jnp.maximum(conv(x, params["conv1_w"], params["conv1_b"]), 0.0))
    y = pool(jnp.maximum(conv(y, params["conv2_w"], params["conv2_b"]), 0.0))
    h = y.reshape(y.shape[0], -1)
    h = jnp.maximum(h @ params["fc1_w"].T + params["fc1_b"], 0.0)
    h = jnp.maximum(h @ params["fc2_w"].T + params["fc2_b"], 0.0)
    return h @ params["fc3_w"].T + params["fc3_b"]


# ----------------------------------------------------------------------------
# Deterministic parameter init (same shapes as the nn.Module; ~PyTorch default)
# ----------------------------------------------------------------------------
def init_params(key):
    def uniform(k, shape, fan_in):
        bound = 1.0 / (fan_in ** 0.5)
        return jax.random.uniform(k, shape, jnp.float32, -bound, bound)

    ks = jax.random.split(key, 10)
    return {
        "conv1_w": uniform(ks[0], (10, 1, 5, 5), 25),
        "conv1_b": uniform(ks[1], (10,), 25),
        "conv2_w": uniform(ks[2], (20, 10, 5, 5), 250),
        "conv2_b": uniform(ks[3], (20,), 250),
        "fc1_w":   uniform(ks[4], (120, 320), 320),
        "fc1_b":   uniform(ks[5], (120,), 320),
        "fc2_w":   uniform(ks[6], (84, 120), 120),
        "fc2_b":   uniform(ks[7], (84,), 120),
        "fc3_w":   uniform(ks[8], (10, 84), 84),
        "fc3_b":   uniform(ks[9], (10,), 84),
    }
    # TODO(synk): training machinery (DataLoader / SGD / CrossEntropyLoss) is
    # host-side and not part of the forward pass; intentionally not ported.


if __name__ == "__main__":
    key = jax.random.PRNGKey(0)
    k_x, k_p = jax.random.split(key)
    params = init_params(k_p)
    fwd = jax.jit(mnist_cnn_forward)

    # Small batch (single tile, grid=(1,)), MNIST-shaped NCHW input.
    batch = 2
    x = jax.random.normal(k_x, (batch, 1, 28, 28), jnp.float32)
    logits = jax.block_until_ready(fwd(x, params))
    assert logits.shape == (batch, 10)
    ref = reference_forward(x, params)
    err = float(jnp.max(jnp.abs(logits - ref)))
    assert jnp.allclose(logits, ref, atol=2e-3, rtol=2e-3), err

    # Larger batch: exercises batch padding and the multi-step parallel grid.
    xb = jax.random.normal(k_x, (20, 1, 28, 28), jnp.float32)
    logits_b = jax.block_until_ready(fwd(xb, params))
    ref_b = reference_forward(xb, params)
    err_b = float(jnp.max(jnp.abs(logits_b - ref_b)))
    assert logits_b.shape == (20, 10)
    assert jnp.allclose(logits_b, ref_b, atol=2e-3, rtol=2e-3), err_b

    print("KERNEL_OK")
</pallas_src>

<mosaic_0001>
module attributes {stable_mosaic.version = 11 : i64} {
  func.func @_mnist_cnn_kernel(%arg0: i32, %arg1: memref<2x28x28xf32, #tpu.memory_space<vmem>>, %arg2: memref<5x28x256xf32, #tpu.memory_space<vmem>>, %arg3: memref<1x128xf32, #tpu.memory_space<vmem>>, %arg4: memref<5x128x256xf32, #tpu.memory_space<vmem>>, %arg5: memref<1x128xf32, #tpu.memory_space<vmem>>, %arg6: memref<4x128x128xf32, #tpu.memory_space<vmem>>, %arg7: memref<1x128xf32, #tpu.memory_space<vmem>>, %arg8: memref<128x128xf32, #tpu.memory_space<vmem>>, %arg9: memref<1x128xf32, #tpu.memory_space<vmem>>, %arg10: memref<128x128xf32, #tpu.memory_space<vmem>>, %arg11: memref<1x128xf32, #tpu.memory_space<vmem>>, %arg12: memref<2x128xf32, #tpu.memory_space<vmem>>, %arg13: memref<2x24x128xf32, #tpu.memory_space<vmem>>, %arg14: memref<2x12x128xf32, #tpu.memory_space<vmem>>, %arg15: memref<2x8x128xf32, #tpu.memory_space<vmem>>, %arg16: memref<2x4x128xf32, #tpu.memory_space<vmem>>) attributes {dimension_semantics = [#tpu.dimension_semantics<parallel>], iteration_bounds = array<i64: 1>, scalar_prefetch = 0 : i64, scratch_operands = 4 : i64, tpu.core_type = #tpu.core_type<tc>, window_params = [{transform_indices = @transform_0, window_bounds = array<i64: 2, 28, 28>}, {pipeline_mode = #tpu.pipeline_mode<synchronous>, transform_indices = @transform_1, window_bounds = array<i64: 5, 28, 256>}, {pipeline_mode = #tpu.pipeline_mode<synchronous>, transform_indices = @transform_2, window_bounds = array<i64: 1, 128>}, {pipeline_mode = #tpu.pipeline_mode<synchronous>, transform_indices = @transform_3, window_bounds = array<i64: 5, 128, 256>}, {pipeline_mode = #tpu.pipeline_mode<synchronous>, transform_indices = @transform_4, window_bounds = array<i64: 1, 128>}, {pipeline_mode = #tpu.pipeline_mode<synchronous>, transform_indices = @transform_5, window_bounds = array<i64: 4, 128, 128>}, {pipeline_mode = #tpu.pipeline_mode<synchronous>, transform_indices = @transform_6, window_bounds = array<i64: 1, 128>}, {pipeline_mode = #tpu.pipeline_mode<synchronous>, transform_indices = @transform_7, window_bounds = array<i64: 128, 128>}, {pipeline_mode = #tpu.pipeline_mode<synchronous>, transform_indices = @transform_8, window_bounds = array<i64: 1, 128>}, {pipeline_mode = #tpu.pipeline_mode<synchronous>, transform_indices = @transform_9, window_bounds = array<i64: 128, 128>}, {pipeline_mode = #tpu.pipeline_mode<synchronous>, transform_indices = @transform_10, window_bounds = array<i64: 1, 128>}, {transform_indices = @transform_11, window_bounds = array<i64: 2, 128>}]} {
    %cst = arith.constant 0.000000e+00 : f32
    %0 = vector.broadcast %cst : f32 to vector<48x256xf32>
    %c0 = arith.constant 0 : index
    %c0_0 = arith.constant 0 : index
    %c0_1 = arith.constant 0 : index
    %1 = vector.load %arg1[%c0, %c0_0, %c0_1] : memref<2x28x28xf32, #tpu.memory_space<vmem>>, vector<2x24x28xf32>
    %2 = vector.shape_cast %1 : vector<2x24x28xf32> to vector<48x28xf32>
    %c0_2 = arith.constant 0 : index
    %c0_3 = arith.constant 0 : index
    %c0_4 = arith.constant 0 : index
    %3 = vector.load %arg2[%c0_2, %c0_3, %c0_4] : memref<5x28x256xf32, #tpu.memory_space<vmem>>, vector<1x28x256xf32>
    %4 = vector.shape_cast %3 : vector<1x28x256xf32> to vector<28x256xf32>
    %cst_5 = arith.constant dense<0.000000e+00> : vector<48x256xf32>
    %5 = tpu.matmul %2, %4, %cst_5 {dimension_numbers = #tpu.dot_dimension_numbers<[1], [0], [0], [1], [0, 0, 1, 1], [], []>} : vector<48x28xf32>, vector<28x256xf32>, vector<48x256xf32> -> vector<48x256xf32>
    %6 = arith.addf %0, %5 : vector<48x256xf32>
    %c0_6 = arith.constant 0 : index
    %c1 = arith.constant 1 : index
    %c0_7 = arith.constant 0 : index
    %7 = vector.load %arg1[%c0_6, %c1, %c0_7] : memref<2x28x28xf32, #tpu.memory_space<vmem>>, vector<2x24x28xf32>
    %8 = vector.shape_cast %7 : vector<2x24x28xf32> to vector<48x28xf32>
    %c1_8 = arith.constant 1 : index
    %c0_9 = arith.constant 0 : index
    %c0_10 = arith.constant 0 : index
    %9 = vector.load %arg2[%c1_8, %c0_9, %c0_10] : memref<5x28x256xf32, #tpu.memory_space<vmem>>, vector<1x28x256xf32>
    %10 = vector.shape_cast %9 : vector<1x28x256xf32> to vector<28x256xf32>
    %cst_11 = arith.constant dense<0.000000e+00> : vector<48x256xf32>
    %11 = tpu.matmul %8, %10, %cst_11 {dimension_numbers = #tpu.dot_dimension_numbers<[1], [0], [0], [1], [0, 0, 1, 1], [], []>} : vector<48x28xf32>, vector<28x256xf32>, vector<48x256xf32> -> vector<48x256xf32>
    %12 = arith.addf %6, %11 : vector<48x256xf32>
    %c0_12 = arith.constant 0 : index
    %c2 = arith.constant 2 : index
    %c0_13 = arith.constant 0 : index
    %13 = vector.load %arg1[%c0_12, %c2, %c0_13] : memref<2x28x28xf32, #tpu.memory_space<vmem>>, vector<2x24x28xf32>
    %14 = vector.shape_cast %13 : vector<2x24x28xf32> to vector<48x28xf32>
    %c2_14 = arith.constant 2 : index
    %c0_15 = arith.constant 0 : index
    %c0_16 = arith.constant 0 : index
    %15 = vector.load %arg2[%c2_14, %c0_15, %c0_16] : memref<5x28x256xf32, #tpu.memory_space<vmem>>, vector<1x28x256xf32>
    %16 = vector.shape_cast %15 : vector<1x28x256xf32> to vector<28x256xf32>
    %cst_17 = arith.constant dense<0.000000e+00> : vector<48x256xf32>
    %17 = tpu.matmul %14, %16, %cst_17 {dimension_numbers = #tpu.dot_dimension_numbers<[1], [0], [0], [1], [0, 0, 1, 1], [], []>} : vector<48x28xf32>, vector<28x256xf32>, vector<48x256xf32> -> vector<48x256xf32>
    %18 = arith.addf %12, %17 : vector<48x256xf32>
    %c0_18 = arith.constant 0 : index
    %c3 = arith.constant 3 : index
    %c0_19 = arith.constant 0 : index
    %19 = vector.load %arg1[%c0_18, %c3, %c0_19] : memref<2x28x28xf32, #tpu.memory_space<vmem>>, vector<2x24x28xf32>
    %20 = vector.shape_cast %19 : vector<2x24x28xf32> to vector<48x28xf32>
    %c3_20 = arith.constant 3 : index
    %c0_21 = arith.constant 0 : index
    %c0_22 = arith.constant 0 : index
    %21 = vector.load %arg2[%c3_20, %c0_21, %c0_22] : memref<5x28x256xf32, #tpu.memory_space<vmem>>, vector<1x28x256xf32>
    %22 = vector.shape_cast %21 : vector<1x28x256xf32> to vector<28x256xf32>
    %cst_23 = arith.constant dense<0.000000e+00> : vector<48x256xf32>
    %23 = tpu.matmul %20, %22, %cst_23 {dimension_numbers = #tpu.dot_dimension_numbers<[1], [0], [0], [1], [0, 0, 1, 1], [], []>} : vector<48x28xf32>, vector<28x256xf32>, vector<48x256xf32> -> vector<48x256xf32>
    %24 = arith.addf %18, %23 : vector<48x256xf32>
    %c0_24 = arith.constant 0 : index
    %c4 = arith.constant 4 : index
    %c0_25 = arith.constant 0 : index
    %25 = vector.load %arg1[%c0_24, %c4, %c0_25] : memref<2x28x28xf32, #tpu.memory_space<vmem>>, vector<2x24x28xf32>
    %26 = vector.shape_cast %25 : vector<2x24x28xf32> to vector<48x28xf32>
    %c4_26 = arith.constant 4 : index
    %c0_27 = arith.constant 0 : index
    %c0_28 = arith.constant 0 : index
    %27 = vector.load %arg2[%c4_26, %c0_27, %c0_28] : memref<5x28x256xf32, #tpu.memory_space<vmem>>, vector<1x28x256xf32>
    %28 = vector.shape_cast %27 : vector<1x28x256xf32> to vector<28x256xf32>
    %cst_29 = arith.constant dense<0.000000e+00> : vector<48x256xf32>
    %29 = tpu.matmul %26, %28, %cst_29 {dimension_numbers = #tpu.dot_dimension_numbers<[1], [0], [0], [1], [0, 0, 1, 1], [], []>} : vector<48x28xf32>, vector<28x256xf32>, vector<48x256xf32> -> vector<48x256xf32>
    %30 = arith.addf %24, %29 : vector<48x256xf32>
    %31 = vector.extract_strided_slice %30 {offsets = [0, 0], sizes = [48, 128], strides = [1, 1]} : vector<48x256xf32> to vector<48x128xf32>
    %32 = vector.extract_strided_slice %30 {offsets = [0, 128], sizes = [48, 128], strides = [1, 1]} : vector<48x256xf32> to vector<48x128xf32>
    %33 = arith.maximumf %31, %32 : vector<48x128xf32>
    %34 = vector.shape_cast %33 : vector<48x128xf32> to vector<2x24x128xf32>
    %c0_30 = arith.constant 0 : index
    %c0_31 = arith.constant 0 : index
    %c0_32 = arith.constant 0 : index
    %35 = vector.load %arg13[%c0_30, %c0_31, %c0_32] : memref<2x24x128xf32, #tpu.memory_space<vmem>>, vector<2x24x128xf32>
    tpu.vector_store %arg13[%c0_30, %c0_31, %c0_32], %34 {strides = array<i32>} : memref<2x24x128xf32, #tpu.memory_space<vmem>>, vector<2x24x128xf32>,
    %c0_33 = arith.constant 0 : index
    %c0_34 = arith.constant 0 : index
    %c0_35 = arith.constant 0 : index
    %36 = tpu.strided_load %arg13[%c0_33, %c0_34, %c0_35] {strides = array<i32: 1, 2, 1>} : memref<2x24x128xf32, #tpu.memory_space<vmem>>, vector<2x12x128xf32>
    %c0_36 = arith.constant 0 : index
    %c1_37 = arith.constant 1 : index
    %c0_38 = arith.constant 0 : index
    %37 = tpu.strided_load %arg13[%c0_36, %c1_37, %c0_38] {strides = array<i32: 1, 2, 1>} : memref<2x24x128xf32, #tpu.memory_space<vmem>>, vector<2x12x128xf32>
    %38 = arith.maximumf %36, %37 : vector<2x12x128xf32>
    %c0_39 = arith.constant 0 : index
    %c0_40 = arith.constant 0 : index
    %39 = vector.load %arg3[%c0_39, %c0_40] : memref<1x128xf32, #tpu.memory_space<vmem>>, vector<1x128xf32>
    %40 = vector.shape_cast %39 : vector<1x128xf32> to vector<1x1x128xf32>
    %41 = vector.broadcast %40 : vector<1x1x128xf32> to vector<2x12x128xf32>
    %42 = arith.addf %38, %41 : vector<2x12x128xf32>
    %cst_41 = arith.constant 0.000000e+00 : f32
    %43 = vector.broadcast %cst_41 : f32 to vector<2x12x128xf32>
    %44 = arith.maximumf %42, %43 : vector<2x12x128xf32>
    %c0_42 = arith.constant 0 : index
    %c0_43 = arith.constant 0 : index
    %c0_44 = arith.constant 0 : index
    %45 = vector.load %arg14[%c0_42, %c0_43, %c0_44] : memref<2x12x128xf32, #tpu.memory_space<vmem>>, vector<2x12x128xf32>
    tpu.vector_store %arg14[%c0_42, %c0_43, %c0_44], %44 {strides = array<i32>} : memref<2x12x128xf32, #tpu.memory_space<vmem>>, vector<2x12x128xf32>,
    %cst_45 = arith.constant 0.000000e+00 : f32
    %46 = vector.broadcast %cst_45 : f32 to vector<16x256xf32>
    %c0_46 = arith.constant 0 : index
    %c0_47 = arith.constant 0 : index
    %c0_48 = arith.constant 0 : index
    %47 = vector.load %arg14[%c0_46, %c0_47, %c0_48] : memref<2x12x128xf32, #tpu.memory_space<vmem>>, vector<2x8x128xf32>
    %48 = vector.shape_cast %47 : vector<2x8x128xf32> to vector<16x128xf32>
    %c0_49 = arith.constant 0 : index
    %c0_50 = arith.constant 0 : index
    %c0_51 = arith.constant 0 : index
    %49 = vector.load %arg4[%c0_49, %c0_50, %c0_51] : memref<5x128x256xf32, #tpu.memory_space<vmem>>, vector<1x128x256xf32>
    %50 = vector.shape_cast %49 : vector<1x128x256xf32> to vector<128x256xf32>
    %cst_52 = arith.constant dense<0.000000e+00> : vector<16x256xf32>
    %51 = tpu.matmul %48, %50, %cst_52 {dimension_numbers = #tpu.dot_dimension_numbers<[1], [0], [0], [1], [0, 0, 1, 1], [], []>} : vector<16x128xf32>, vector<128x256xf32>, vector<16x256xf32> -> vector<16x256xf32>
    %52 = arith.addf %46, %51 : vector<16x256xf32>
    %c0_53 = arith.constant 0 : index
    %c1_54 = arith.constant 1 : index
    %c0_55 = arith.constant 0 : index
    %53 = vector.load %arg14[%c0_53, %c1_54, %c0_55] : memref<2x12x128xf32, #tpu.memory_space<vmem>>, vector<2x8x128xf32>
    %54 = vector.shape_cast %53 : vector<2x8x128xf32> to vector<16x128xf32>
    %c1_56 = arith.constant 1 : index
    %c0_57 = arith.constant 0 : index
    %c0_58 = arith.constant 0 : index
    %55 = vector.load %arg4[%c1_56, %c0_57, %c0_58] : memref<5x128x256xf32, #tpu.memory_space<vmem>>, vector<1x128x256xf32>
    %56 = vector.shape_cast %55 : vector<1x128x256xf32> to vector<128x256xf32>
    %cst_59 = arith.constant dense<0.000000e+00> : vector<16x256xf32>
    %57 = tpu.matmul %54, %56, %cst_59 {dimension_numbers = #tpu.dot_dimension_numbers<[1], [0], [0], [1], [0, 0, 1, 1], [], []>} : vector<16x128xf32>, vector<128x256xf32>, vector<16x256xf32> -> vector<16x256xf32>
    %58 = arith.addf %52, %57 : vector<16x256xf32>
    %c0_60 = arith.constant 0 : index
    %c2_61 = arith.constant 2 : index
    %c0_62 = arith.constant 0 : index
    %59 = vector.load %arg14[%c0_60, %c2_61, %c0_62] : memref<2x12x128xf32, #tpu.memory_space<vmem>>, vector<2x8x128xf32>
    %60 = vector.shape_cast %59 : vector<2x8x128xf32> to vector<16x128xf32>
    %c2_63 = arith.constant 2 : index
    %c0_64 = arith.constant 0 : index
    %c0_65 = arith.constant 0 : index
    %61 = vector.load %arg4[%c2_63, %c0_64, %c0_65] : memref<5x128x256xf32, #tpu.memory_space<vmem>>, vector<1x128x256xf32>
    %62 = vector.shape_cast %61 : vector<1x128x256xf32> to vector<128x256xf32>
    %cst_66 = arith.constant dense<0.000000e+00> : vector<16x256xf32>
    %63 = tpu.matmul %60, %62, %cst_66 {dimension_numbers = #tpu.dot_dimension_numbers<[1], [0], [0], [1], [0, 0, 1, 1], [], []>} : vector<16x128xf32>, vector<128x256xf32>, vector<16x256xf32> -> vector<16x256xf32>
    %64 = arith.addf %58, %63 : vector<16x256xf32>
    %c0_67 = arith.constant 0 : index
    %c3_68 = arith.constant 3 : index
    %c0_69 = arith.constant 0 : index
    %65 = vector.load %arg14[%c0_67, %c3_68, %c0_69] : memref<2x12x128xf32, #tpu.memory_space<vmem>>, vector<2x8x128xf32>
    %66 = vector.shape_cast %65 : vector<2x8x128xf32> to vector<16x128xf32>
    %c3_70 = arith.constant 3 : index
    %c0_71 = arith.constant 0 : index
    %c0_72 = arith.constant 0 : index
    %67 = vector.load %arg4[%c3_70, %c0_71, %c0_72] : memref<5x128x256xf32, #tpu.memory_space<vmem>>, vector<1x128x256xf32>
    %68 = vector.shape_cast %67 : vector<1x128x256xf32> to vector<128x256xf32>
    %cst_73 = arith.constant dense<0.000000e+00> : vector<16x256xf32>
    %69 = tpu.matmul %66, %68, %cst_73 {dimension_numbers = #tpu.dot_dimension_numbers<[1], [0], [0], [1], [0, 0, 1, 1], [], []>} : vector<16x128xf32>, vector<128x256xf32>, vector<16x256xf32> -> vector<16x256xf32>
    %70 = arith.addf %64, %69 : vector<16x256xf32>
    %c0_74 = arith.constant 0 : index
    %c4_75 = arith.constant 4 : index
    %c0_76 = arith.constant 0 : index
    %71 = vector.load %arg14[%c0_74, %c4_75, %c0_76] : memref<2x12x128xf32, #tpu.memory_space<vmem>>, vector<2x8x128xf32>
    %72 = vector.shape_cast %71 : vector<2x8x128xf32> to vector<16x128xf32>
    %c4_77 = arith.constant 4 : index
    %c0_78 = arith.constant 0 : index
    %c0_79 = arith.constant 0 : index
    %73 = vector.load %arg4[%c4_77, %c0_78, %c0_79] : memref<5x128x256xf32, #tpu.memory_space<vmem>>, vector<1x128x256xf32>
    %74 = vector.shape_cast %73 : vector<1x128x256xf32> to vector<128x256xf32>
    %cst_80 = arith.constant dense<0.000000e+00> : vector<16x256xf32>
    %75 = tpu.matmul %72, %74, %cst_80 {dimension_numbers = #tpu.dot_dimension_numbers<[1], [0], [0], [1], [0, 0, 1, 1], [], []>} : vector<16x128xf32>, vector<128x256xf32>, vector<16x256xf32> -> vector<16x256xf32>
    %76 = arith.addf %70, %75 : vector<16x256xf32>
    %77 = vector.extract_strided_slice %76 {offsets = [0, 0], sizes = [16, 128], strides = [1, 1]} : vector<16x256xf32> to vector<16x128xf32>
    %78 = vector.extract_strided_slice %76 {offsets = [0, 128], sizes = [16, 128], strides = [1, 1]} : vector<16x256xf32> to vector<16x128xf32>
    %79 = arith.maximumf %77, %78 : vector<16x128xf32>
    %80 = vector.shape_cast %79 : vector<16x128xf32> to vector<2x8x128xf32>
    %c0_81 = arith.constant 0 : index
    %c0_82 = arith.constant 0 : index
    %c0_83 = arith.constant 0 : index
    %81 = vector.load %arg15[%c0_81, %c0_82, %c0_83] : memref<2x8x128xf32, #tpu.memory_space<vmem>>, vector<2x8x128xf32>
    tpu.vector_store %arg15[%c0_81, %c0_82, %c0_83], %80 {strides = array<i32>} : memref<2x8x128xf32, #tpu.memory_space<vmem>>, vector<2x8x128xf32>,
    %c0_84 = arith.constant 0 : index
    %c0_85 = arith.constant 0 : index
    %c0_86 = arith.constant 0 : index
    %82 = tpu.strided_load %arg15[%c0_84, %c0_85, %c0_86] {strides = array<i32: 1, 2, 1>} : memref<2x8x128xf32, #tpu.memory_space<vmem>>, vector<2x4x128xf32>
    %c0_87 = arith.constant 0 : index
    %c1_88 = arith.constant 1 : index
    %c0_89 = arith.constant 0 : index
    %83 = tpu.strided_load %arg15[%c0_87, %c1_88, %c0_89] {strides = array<i32: 1, 2, 1>} : memref<2x8x128xf32, #tpu.memory_space<vmem>>, vector<2x4x128xf32>
    %84 = arith.maximumf %82, %83 : vector<2x4x128xf32>
    %c0_90 = arith.constant 0 : index
    %c0_91 = arith.constant 0 : index
    %85 = vector.load %arg5[%c0_90, %c0_91] : memref<1x128xf32, #tpu.memory_space<vmem>>, vector<1x128xf32>
    %86 = vector.shape_cast %85 : vector<1x128xf32> to vector<1x1x128xf32>
    %87 = vector.broadcast %86 : vector<1x1x128xf32> to vector<2x4x128xf32>
    %88 = arith.addf %84, %87 : vector<2x4x128xf32>
    %cst_92 = arith.constant 0.000000e+00 : f32
    %89 = vector.broadcast %cst_92 : f32 to vector<2x4x128xf32>
    %90 = arith.maximumf %88, %89 : vector<2x4x128xf32>
    %c0_93 = arith.constant 0 : index
    %c0_94 = arith.constant 0 : index
    %c0_95 = arith.constant 0 : index
    %91 = vector.load %arg16[%c0_93, %c0_94, %c0_95] : memref<2x4x128xf32, #tpu.memory_space<vmem>>, vector<2x4x128xf32>
    tpu.vector_store %arg16[%c0_93, %c0_94, %c0_95], %90 {strides = array<i32>} : memref<2x4x128xf32, #tpu.memory_space<vmem>>, vector<2x4x128xf32>,
    %cst_96 = arith.constant 0.000000e+00 : f32
    %92 = vector.broadcast %cst_96 : f32 to vector<2x128xf32>
    %c0_97 = arith.constant 0 : index
    %c0_98 = arith.constant 0 : index
    %c0_99 = arith.constant 0 : index
    %93 = vector.load %arg16[%c0_97, %c0_98, %c0_99] : memref<2x4x128xf32, #tpu.memory_space<vmem>>, vector<2x1x128xf32>
    %94 = vector.shape_cast %93 : vector<2x1x128xf32> to vector<2x128xf32>
    %c0_100 = arith.constant 0 : index
    %c0_101 = arith.constant 0 : index
    %c0_102 = arith.constant 0 : index
    %95 = vector.load %arg6[%c0_100, %c0_101, %c0_102] : memref<4x128x128xf32, #tpu.memory_space<vmem>>, vector<1x128x128xf32>
    %96 = vector.shape_cast %95 : vector<1x128x128xf32> to vector<128x128xf32>
    %cst_103 = arith.constant dense<0.000000e+00> : vector<2x128xf32>
    %97 = tpu.matmul %94, %96, %cst_103 {dimension_numbers = #tpu.dot_dimension_numbers<[1], [0], [0], [1], [0, 0, 1, 1], [], []>} : vector<2x128xf32>, vector<128x128xf32>, vector<2x128xf32> -> vector<2x128xf32>
    %98 = arith.addf %92, %97 : vector<2x128xf32>
    %c0_104 = arith.constant 0 : index
    %c1_105 = arith.constant 1 : index
    %c0_106 = arith.constant 0 : index
    %99 = vector.load %arg16[%c0_104, %c1_105, %c0_106] : memref<2x4x128xf32, #tpu.memory_space<vmem>>, vector<2x1x128xf32>
    %100 = vector.shape_cast %99 : vector<2x1x128xf32> to vector<2x128xf32>
    %c1_107 = arith.constant 1 : index
    %c0_108 = arith.constant 0 : index
    %c0_109 = arith.constant 0 : index
    %101 = vector.load %arg6[%c1_107, %c0_108, %c0_109] : memref<4x128x128xf32, #tpu.memory_space<vmem>>, vector<1x128x128xf32>
    %102 = vector.shape_cast %101 : vector<1x128x128xf32> to vector<128x128xf32>
    %cst_110 = arith.constant dense<0.000000e+00> : vector<2x128xf32>
    %103 = tpu.matmul %100, %102, %cst_110 {dimension_numbers = #tpu.dot_dimension_numbers<[1], [0], [0], [1], [0, 0, 1, 1], [], []>} : vector<2x128xf32>, vector<128x128xf32>, vector<2x128xf32> -> vector<2x128xf32>
    %104 = arith.addf %98, %103 : vector<2x128xf32>
    %c0_111 = arith.constant 0 : index
    %c2_112 = arith.constant 2 : index
    %c0_113 = arith.constant 0 : index
    %105 = vector.load %arg16[%c0_111, %c2_112, %c0_113] : memref<2x4x128xf32, #tpu.memory_space<vmem>>, vector<2x1x128xf32>
    %106 = vector.shape_cast %105 : vector<2x1x128xf32> to vector<2x128xf32>
    %c2_114 = arith.constant 2 : index
    %c0_115 = arith.constant 0 : index
    %c0_116 = arith.constant 0 : index
    %107 = vector.load %arg6[%c2_114, %c0_115, %c0_116] : memref<4x128x128xf32, #tpu.memory_space<vmem>>, vector<1x128x128xf32>
    %108 = vector.shape_cast %107 : vector<1x128x128xf32> to vector<128x128xf32>
    %cst_117 = arith.constant dense<0.000000e+00> : vector<2x128xf32>
    %109 = tpu.matmul %106, %108, %cst_117 {dimension_numbers = #tpu.dot_dimension_numbers<[1], [0], [0], [1], [0, 0, 1, 1], [], []>} : vector<2x128xf32>, vector<128x128xf32>, vector<2x128xf32> -> vector<2x128xf32>
    %110 = arith.addf %104, %109 : vector<2x128xf32>
    %c0_118 = arith.constant 0 : index
    %c3_119 = arith.constant 3 : index
    %c0_120 = arith.constant 0 : index
    %111 = vector.load %arg16[%c0_118, %c3_119, %c0_120] : memref<2x4x128xf32, #tpu.memory_space<vmem>>, vector<2x1x128xf32>
    %112 = vector.shape_cast %111 : vector<2x1x128xf32> to vector<2x128xf32>
    %c3_121 = arith.constant 3 : index
    %c0_122 = arith.constant 0 : index
    %c0_123 = arith.constant 0 : index
    %113 = vector.load %arg6[%c3_121, %c0_122, %c0_123] : memref<4x128x128xf32, #tpu.memory_space<vmem>>, vector<1x128x128xf32>
    %114 = vector.shape_cast %113 : vector<1x128x128xf32> to vector<128x128xf32>
    %cst_124 = arith.constant dense<0.000000e+00> : vector<2x128xf32>
    %115 = tpu.matmul %112, %114, %cst_124 {dimension_numbers = #tpu.dot_dimension_numbers<[1], [0], [0], [1], [0, 0, 1, 1], [], []>} : vector<2x128xf32>, vector<128x128xf32>, vector<2x128xf32> -> vector<2x128xf32>
    %116 = arith.addf %110, %115 : vector<2x128xf32>
    %c0_125 = arith.constant 0 : index
    %c0_126 = arith.constant 0 : index
    %117 = vector.load %arg7[%c0_125, %c0_126] : memref<1x128xf32, #tpu.memory_space<vmem>>, vector<1x128xf32>
    %118 = vector.broadcast %117 : vector<1x128xf32> to vector<2x128xf32>
    %119 = arith.addf %116, %118 : vector<2x128xf32>
    %cst_127 = arith.constant 0.000000e+00 : f32
    %120 = vector.broadcast %cst_127 : f32 to vector<2x128xf32>
    %121 = arith.maximumf %119, %120 : vector<2x128xf32>
    %c0_128 = arith.constant 0 : index
    %c0_129 = arith.constant 0 : index
    %122 = vector.load %arg8[%c0_128, %c0_129] : memref<128x128xf32, #tpu.memory_space<vmem>>, vector<128x128xf32>
    %cst_130 = arith.constant dense<0.000000e+00> : vector<2x128xf32>
    %123 = tpu.matmul %121, %122, %cst_130 {dimension_numbers = #tpu.dot_dimension_numbers<[1], [0], [0], [1], [0, 0, 1, 1], [], []>} : vector<2x128xf32>, vector<128x128xf32>, vector<2x128xf32> -> vector<2x128xf32>
    %c0_131 = arith.constant 0 : index
    %c0_132 = arith.constant 0 : index
    %124 = vector.load %arg9[%c0_131, %c0_132] : memref<1x128xf32, #tpu.memory_space<vmem>>, vector<1x128xf32>
    %125 = vector.broadcast %124 : vector<1x128xf32> to vector<2x128xf32>
    %126 = arith.addf %123, %125 : vector<2x128xf32>
    %cst_133 = arith.constant 0.000000e+00 : f32
    %127 = vector.broadcast %cst_133 : f32 to vector<2x128xf32>
    %128 = arith.maximumf %126, %127 : vector<2x128xf32>
    %c0_134 = arith.constant 0 : index
    %c0_135 = arith.constant 0 : index
    %129 = vector.load %arg10[%c0_134, %c0_135] : memref<128x128xf32, #tpu.memory_space<vmem>>, vector<128x128xf32>
    %cst_136 = arith.constant dense<0.000000e+00> : vector<2x128xf32>
    %130 = tpu.matmul %128, %129, %cst_136 {dimension_numbers = #tpu.dot_dimension_numbers<[1], [0], [0], [1], [0, 0, 1, 1], [], []>} : vector<2x128xf32>, vector<128x128xf32>, vector<2x128xf32> -> vector<2x128xf32>
    %c0_137 = arith.constant 0 : index
    %c0_138 = arith.constant 0 : index
    %131 = vector.load %arg11[%c0_137, %c0_138] : memref<1x128xf32, #tpu.memory_space<vmem>>, vector<1x128xf32>
    %132 = vector.broadcast %131 : vector<1x128xf32> to vector<2x128xf32>
    %133 = arith.addf %130, %132 : vector<2x128xf32>
    %c0_139 = arith.constant 0 : index
    %c0_140 = arith.constant 0 : index
    %134 = vector.load %arg12[%c0_139, %c0_140] : memref<2x128xf32, #tpu.memory_space<vmem>>, vector<2x128xf32>
    tpu.vector_store %arg12[%c0_139, %c0_140], %133 {strides = array<i32>} : memref<2x128xf32, #tpu.memory_space<vmem>>, vector<2x128xf32>,
    return
  }
  func.func @transform_0(%arg0: i32) -> (i32, i32, i32) {
    %c0_i32 = arith.constant 0 : i32
    %c0_i32_0 = arith.constant 0 : i32
    %c0_i32_1 = arith.constant 0 : i32
    return %arg0, %c0_i32, %c0_i32_0 : i32, i32, i32
  }
  func.func @transform_1(%arg0: i32) -> (i32, i32, i32) {
    %c0_i32 = arith.constant 0 : i32
    %c0_i32_0 = arith.constant 0 : i32
    %c0_i32_1 = arith.constant 0 : i32
    %c0_i32_2 = arith.constant 0 : i32
    return %c0_i32, %c0_i32_0, %c0_i32_1 : i32, i32, i32
  }
  func.func @transform_2(%arg0: i32) -> (i32, i32) {
    %c0_i32 = arith.constant 0 : i32
    %c0_i32_0 = arith.constant 0 : i32
    %c0_i32_1 = arith.constant 0 : i32
    return %c0_i32, %c0_i32_0 : i32, i32
  }
  func.func @transform_3(%arg0: i32) -> (i32, i32, i32) {
    %c0_i32 = arith.constant 0 : i32
    %c0_i32_0 = arith.constant 0 : i32
    %c0_i32_1 = arith.constant 0 : i32
    %c0_i32_2 = arith.constant 0 : i32
    return %c0_i32, %c0_i32_0, %c0_i32_1 : i32, i32, i32
  }
  func.func @transform_4(%arg0: i32) -> (i32, i32) {
    %c0_i32 = arith.constant 0 : i32
    %c0_i32_0 = arith.constant 0 : i32
    %c0_i32_1 = arith.constant 0 : i32
    return %c0_i32, %c0_i32_0 : i32, i32
  }
  func.func @transform_5(%arg0: i32) -> (i32, i32, i32) {
    %c0_i32 = arith.constant 0 : i32
    %c0_i32_0 = arith.constant 0 : i32
    %c0_i32_1 = arith.constant 0 : i32
    %c0_i32_2 = arith.constant 0 : i32
    return %c0_i32, %c0_i32_0, %c0_i32_1 : i32, i32, i32
  }
  func.func @transform_6(%arg0: i32) -> (i32, i32) {
    %c0_i32 = arith.constant 0 : i32
    %c0_i32_0 = arith.constant 0 : i32
    %c0_i32_1 = arith.constant 0 : i32
    return %c0_i32, %c0_i32_0 : i32, i32
  }
  func.func @transform_7(%arg0: i32) -> (i32, i32) {
    %c0_i32 = arith.constant 0 : i32
    %c0_i32_0 = arith.constant 0 : i32
    %c0_i32_1 = arith.constant 0 : i32
    return %c0_i32, %c0_i32_0 : i32, i32
  }
  func.func @transform_8(%arg0: i32) -> (i32, i32) {
    %c0_i32 = arith.constant 0 : i32
    %c0_i32_0 = arith.constant 0 : i32
    %c0_i32_1 = arith.constant 0 : i32
    return %c0_i32, %c0_i32_0 : i32, i32
  }
  func.func @transform_9(%arg0: i32) -> (i32, i32) {
    %c0_i32 = arith.constant 0 : i32
    %c0_i32_0 = arith.constant 0 : i32
    %c0_i32_1 = arith.constant 0 : i32
    return %c0_i32, %c0_i32_0 : i32, i32
  }
  func.func @transform_10(%arg0: i32) -> (i32, i32) {
    %c0_i32 = arith.constant 0 : i32
    %c0_i32_0 = arith.constant 0 : i32
    %c0_i32_1 = arith.constant 0 : i32
    return %c0_i32, %c0_i32_0 : i32, i32
  }
  func.func @transform_11(%arg0: i32) -> (i32, i32) {
    %c0_i32 = arith.constant 0 : i32
    %c0_i32_0 = arith.constant 0 : i32
    return %arg0, %c0_i32 : i32, i32
  }
}

</mosaic_0001>

<llo_original>
// kernel: tile.18
$region0: #{tile.18}
  #allocation0 [shape = 's32[1]{0}', space=sflag, size = 0x4, scoped, tag = 'scoped memory for tile.18']
  %s0 = inlined_call_operand.vmem [shape: f32[20], index: 0, kind: input, shape index: {}]
  %s1 = inlined_call_operand.vmem [shape: f32[4,20], index: 1, kind: output, shape index: {}]
  // Predicated region
  $region2: #{tile.18} parent=0 // pred_check
    _
  $region3: #{tile.18} parent=0 // pred_check_branch
    %3 = sbr.rel (0) target = $region5
  $region4: #{tile.18} parent=0 // pred_region
    _
  $region5: #{tile.18} parent=0 // pred_fallthru
    _
  %v4 = vld [vmem:[%s0] ss:$0 sm:$0xff]
  %5 = vst [vmem:[%s1] sm:$0xf] %v4

// kernel: tile.19
$region0: #{tile.19}
  %s0 = inlined_call_operand.vmem [shape: f32[4,20], index: 0, kind: input, shape index: {}]
  %s1 = inlined_call_operand.vmem [shape: f32[80], index: 1, kind: output, shape index: {}]
  $region1: #{tile.19} parent=0
    #allocation0 [shape = 'u8[4096]{0}', space=vmem, size = 0x1000, scoped, tag = 'scoped mem for output reshape']
    #allocation1 [shape = 'u8[4096]{0}', space=vmem, size = 0x1000, scoped, tag = 'scoped mem for input reshape']
    %s3 = sshllo.u32 0, 4
    %v4 = vld [vmem:[%s0] sm:%s3]
    %5 = vst [vmem:[#allocation1] sm:%s3] %v4
    %v6 = vld [vmem:[#allocation1] sm:$0x1]
    %vm7 = vcmask 162816
    %8 = vst.msk [vmem:[#allocation0] sm:$0x1] %vm7, %v6
    %s9 = scalar_lea.vmem [#allocation1], 3
    %v10 = vld [vmem:[%s9] sm:$0x1]
    %11 = vrot.lane.b32.xlu0 %v10, 60
    %v12 = vpop.permute.xlu0 %11
    %vm13 = vcmask 654816
    %14 = vst.msk [vmem:[#allocation0] sm:$0x1] %vm13, %v12
    %s15 = scalar_lea.vmem [#allocation1], 2
    %v16 = vld [vmem:[%s15] sm:$0x1]
    %17 = vrot.lane.b32.xlu0 %v16, 40
    %v18 = vpop.permute.xlu0 %17
    %vm19 = vcmask 490816
    %20 = vst.msk [vmem:[#allocation0] sm:$0x1] %vm19, %v18
    %s21 = scalar_lea.vmem [#allocation1], 1
    %v22 = vld [vmem:[%s21] sm:$0x1]
    %23 = vrot.lane.b32.xlu0 %v22, 20
    %v24 = vpop.permute.xlu0 %23
    %vm25 = vcmask 326816
    %26 = vst.msk [vmem:[#allocation0] sm:$0x1] %vm25, %v24
    %s28 = sshllo.u32 0, 1
    %v30 = vld [vmem:[#allocation0] sm:%s28]
    %s31 = sshllo.u32 0, 1
    %32 = vst [vmem:[%s1] sm:%s31] %v30

// kernel: tile.13
$region0: #{tile.13}
  #allocation0 [shape = 's32[1]{0}', space=sflag, size = 0x4, scoped, tag = 'scoped memory for tile.13']
  %s0 = inlined_call_operand.vmem [shape: f32[10], index: 0, kind: input, shape index: {}]
  %s1 = inlined_call_operand.vmem [shape: f32[12,10], index: 1, kind: output, shape index: {}]
  // Predicated region
  $region2: #{tile.13} parent=0 // pred_check
    _
  $region3: #{tile.13} parent=0 // pred_check_branch
    %3 = sbr.rel (0) target = $region5
  $region4: #{tile.13} parent=0 // pred_region
    _
  $region5: #{tile.13} parent=0 // pred_fallthru
    _
  %v4 = vld [vmem:[%s0] ss:$0 sm:$0xff]
  %5 = vst [vmem:[%s1] sm:$0xff] %v4
  %s6 = scalar_lea.vmem %s1, 8
  %7 = vst [vmem:[%s6] sm:$0xff] %v4

// kernel: tile.14
$region0: #{tile.14}
  %s0 = inlined_call_operand.vmem [shape: f32[12,10], index: 0, kind: input, shape index: {}]
  %s1 = inlined_call_operand.vmem [shape: f32[120], index: 1, kind: output, shape index: {}]
  $region1: #{tile.14} parent=0
    #allocation0 [shape = 'u8[4096]{0}', space=vmem, size = 0x1000, scoped, tag = 'scoped mem for output reshape']
    %v2 = vld [vmem:[%s0] sm:$0x1]
    %vm3 = vcmask 80896
    %4 = vst.msk [vmem:[#allocation0] sm:$0x1] %vm3, %v2
    %s5 = scalar_lea.vmem %s0, 11
    %v6 = vld [vmem:[%s5] sm:$0x1]
    %7 = vrot.lane.b32.xlu0 %v6, 110
    %v8 = vpop.permute.xlu0 %7
    %vm9 = vcmask 982896
    %10 = vst.msk [vmem:[#allocation0] sm:$0x1] %vm9, %v8
    %s11 = scalar_lea.vmem %s0, 10
    %v12 = vld [vmem:[%s11] sm:$0x1]
    %13 = vrot.lane.b32.xlu0 %v12, 100
    %v14 = vpop.permute.xlu0 %13
    %vm15 = vcmask 900896
    %16 = vst.msk [vmem:[#allocation0] sm:$0x1] %vm15, %v14
    %s17 = scalar_lea.vmem %s0, 9
    %v18 = vld [vmem:[%s17] sm:$0x1]
    %19 = vrot.lane.b32.xlu0 %v18, 90
    %v20 = vpop.permute.xlu0 %19
    %vm21 = vcmask 818896
    %22 = vst.msk [vmem:[#allocation0] sm:$0x1] %vm21, %v20
    %s23 = scalar_lea.vmem %s0, 8
    %v24 = vld [vmem:[%s23] sm:$0x1]
    %25 = vrot.lane.b32.xlu0 %v24, 80
    %v26 = vpop.permute.xlu0 %25
    %vm27 = vcmask 736896
    %28 = vst.msk [vmem:[#allocation0] sm:$0x1] %vm27, %v26
    %s29 = scalar_lea.vmem %s0, 7
    %v30 = vld [vmem:[%s29] sm:$0x1]
    %31 = vrot.lane.b32.xlu0 %v30, 70
    %v32 = vpop.permute.xlu0 %31
    %vm33 = vcmask 654896
    %34 = vst.msk [vmem:[#allocation0] sm:$0x1] %vm33, %v32
    %s35 = scalar_lea.vmem %s0, 6
    %v36 = vld [vmem:[%s35] sm:$0x1]
    %37 = vrot.lane.b32.xlu0 %v36, 60
    %v38 = vpop.permute.xlu0 %37
    %vm39 = vcmask 572896
    %40 = vst.msk [vmem:[#allocation0] sm:$0x1] %vm39, %v38
    %s41 = scalar_lea.vmem %s0, 5
    %v42 = vld [vmem:[%s41] sm:$0x1]
    %43 = vrot.lane.b32.xlu0 %v42, 50
    %v44 = vpop.permute.xlu0 %43
    %vm45 = vcmask 490896
    %46 = vst.msk [vmem:[#allocation0] sm:$0x1] %vm45, %v44
    %s47 = scalar_lea.vmem %s0, 4
    %v48 = vld [vmem:[%s47] sm:$0x1]
    %49 = vrot.lane.b32.xlu0 %v48, 40
    %v50 = vpop.permute.xlu0 %49
    %vm51 = vcmask 408896
    %52 = vst.msk [vmem:[#allocation0] sm:$0x1] %vm51, %v50
    %s53 = scalar_lea.vmem %s0, 3
    %v54 = vld [vmem:[%s53] sm:$0x1]
    %55 = vrot.lane.b32.xlu0 %v54, 30
    %v56 = vpop.permute.xlu0 %55
    %vm57 = vcmask 326896
    %58 = vst.msk [vmem:[#allocation0] sm:$0x1] %vm57, %v56
    %s59 = scalar_lea.vmem %s0, 2
    %v60 = vld [vmem:[%s59] sm:$0x1]
    %61 = vrot.lane.b32.xlu0 %v60, 20
    %v62 = vpop.permute.xlu0 %61
    %vm63 = vcmask 244896
    %64 = vst.msk [vmem:[#allocation0] sm:$0x1] %vm63, %v62
    %s65 = scalar_lea.vmem %s0, 1
    %v66 = vld [vmem:[%s65] sm:$0x1]
    %67 = vrot.lane.b32.xlu0 %v66, 10
    %v68 = vpop.permute.xlu0 %67
    %vm69 = vcmask 162896
    %70 = vst.msk [vmem:[#allocation0] sm:$0x1] %vm69, %v68
    %s72 = sshllo.u32 0, 1
    %v74 = vld [vmem:[#allocation0] sm:%s72]
    %s75 = sshllo.u32 0, 1
    %76 = vst [vmem:[%s1] sm:%s75] %v74

// kernel: mnist_cnn_forward.1
$region0: #{mnist_cnn_forward.1}
  #allocation0 [shape = 'u32[]', space=smem, size = 0x4, offset = 0x4, fixed_abs, tag = 'smem constant byte address 0x4 - core index']
  #allocation1 [shape = 'u32[144,128]{1,0:T(1,128)}', space=vmem, size = 0x12000, scoped, tag = 'internal scratch']
  #allocation2 [shape = 'f32[2,24,128]{2,1,0:T(8,128)}', space=vmem, size = 0x6000, scoped, tag = 'scratch operand']
  #allocation3 [shape = 'f32[2,12,128]{2,1,0:T(8,128)}', space=vmem, size = 0x4000, scoped, tag = 'scratch operand']
  #allocation4 [shape = 'f32[2,8,128]{2,1,0:T(8,128)}', space=vmem, size = 0x2000, scoped, tag = 'scratch operand']
  #allocation5 [shape = 'f32[2,4,128]{2,1,0:T(4,128)}', space=vmem, size = 0x1000, scoped, tag = 'scratch operand']
  %s0 = inlined_call_operand.vmem [shape: f32[2,28,28], index: 0, kind: input, shape index: {}]
  %s1 = inlined_call_operand.vmem [shape: f32[5,28,256], index: 1, kind: input, shape index: {}]
  %s2 = inlined_call_operand.vmem [shape: f32[1,128], index: 2, kind: input, shape index: {}]
  %s3 = inlined_call_operand.vmem [shape: f32[5,128,256], index: 3, kind: input, shape index: {}]
  %s4 = inlined_call_operand.vmem [shape: f32[1,128], index: 4, kind: input, shape index: {}]
  %s5 = inlined_call_operand.vmem [shape: f32[4,128,128], index: 5, kind: input, shape index: {}]
  %s6 = inlined_call_operand.vmem [shape: f32[1,128], index: 6, kind: input, shape index: {}]
  %s7 = inlined_call_operand.vmem [shape: f32[128,128], index: 7, kind: input, shape index: {}]
  %s8 = inlined_call_operand.vmem [shape: f32[1,128], index: 8, kind: input, shape index: {}]
  %s9 = inlined_call_operand.vmem [shape: f32[128,128], index: 9, kind: input, shape index: {}]
  %s10 = inlined_call_operand.vmem [shape: f32[1,128], index: 10, kind: input, shape index: {}]
  %s11 = inlined_call_operand.hbm [shape: f32[2,128], index: 11, kind: output, shape index: {}]
  %s12 = sld [smem:[#allocation0]]
  $region54: #{mnist_cnn_forward.1} parent=0
    _
  %s14 = ssub.s32 1, %s12
  %s15 = scalar_select 0, %s14, %s12
  $region1: #{mnist_cnn_forward.1} parent=0
    #allocation6 [shape = 'u8[1024]{0}', space=vmem, size = 0x400, scoped, tag = 'output window, operand 0, single buffered']
    #allocation7 [shape = 's32[1]{0}', space=sflag, size = 0x4, scoped, tag = 'scoped memory for mnist_cnn_forward.1']
    %16 = vsyncpa [#allocation7], 0
    // Predicated region
    $region2: #{mnist_cnn_forward.1} parent=1 // pred_check
      _
    $region3: #{mnist_cnn_forward.1} parent=1 // pred_check_branch
      %18 = sbr.rel (0) target = $region5
    $region4: #{mnist_cnn_forward.1} parent=1 // pred_region
      _
    $region5: #{mnist_cnn_forward.1} parent=1 // pred_fallthru
      _
    // Predicated region
    $region6: #{mnist_cnn_forward.1} parent=1 // pred_check
      _
    $region7: #{mnist_cnn_forward.1} parent=1 // pred_check_branch
      %20 = sbr.rel (0) target = $region9
    $region8: #{mnist_cnn_forward.1} parent=1 // pred_region
      _
    $region9: #{mnist_cnn_forward.1} parent=1 // pred_fallthru
      _
    // Predicated region
    $region10: #{mnist_cnn_forward.1} parent=1 // pred_check
      _
    $region11: #{mnist_cnn_forward.1} parent=1 // pred_check_branch
      %22 = sbr.rel (0) target = $region13
    $region12: #{mnist_cnn_forward.1} parent=1 // pred_region
      _
    $region13: #{mnist_cnn_forward.1} parent=1 // pred_fallthru
      _
    // Predicated region
    $region14: #{mnist_cnn_forward.1} parent=1 // pred_check
      _
    $region15: #{mnist_cnn_forward.1} parent=1 // pred_check_branch
      %24 = sbr.rel (0) target = $region17
    $region16: #{mnist_cnn_forward.1} parent=1 // pred_region
      _
    $region17: #{mnist_cnn_forward.1} parent=1 // pred_fallthru
      _
    // Predicated region
    $region18: #{mnist_cnn_forward.1} parent=1 // pred_check
      _
    $region19: #{mnist_cnn_forward.1} parent=1 // pred_check_branch
      %26 = sbr.rel (0) target = $region21
    $region20: #{mnist_cnn_forward.1} parent=1 // pred_region
      _
    $region21: #{mnist_cnn_forward.1} parent=1 // pred_fallthru
      _
    // Predicated region
    $region22: #{mnist_cnn_forward.1} parent=1 // pred_check
      _
    $region23: #{mnist_cnn_forward.1} parent=1 // pred_check_branch
      %28 = sbr.rel (0) target = $region25
    $region24: #{mnist_cnn_forward.1} parent=1 // pred_region
      _
    $region25: #{mnist_cnn_forward.1} parent=1 // pred_fallthru
      _
    // Predicated region
    $region26: #{mnist_cnn_forward.1} parent=1 // pred_check
      _
    $region27: #{mnist_cnn_forward.1} parent=1 // pred_check_branch
      %30 = sbr.rel (0) target = $region29
    $region28: #{mnist_cnn_forward.1} parent=1 // pred_region
      _
    $region29: #{mnist_cnn_forward.1} parent=1 // pred_fallthru
      _
    // Predicated region
    $region30: #{mnist_cnn_forward.1} parent=1 // pred_check
      _
    $region31: #{mnist_cnn_forward.1} parent=1 // pred_check_branch
      %32 = sbr.rel (0) target = $region33
    $region32: #{mnist_cnn_forward.1} parent=1 // pred_region
      _
    $region33: #{mnist_cnn_forward.1} parent=1 // pred_fallthru
      _
    // Predicated region
    $region34: #{mnist_cnn_forward.1} parent=1 // pred_check
      _
    $region35: #{mnist_cnn_forward.1} parent=1 // pred_check_branch
      %34 = sbr.rel (0) target = $region37
    $region36: #{mnist_cnn_forward.1} parent=1 // pred_region
      _
    $region37: #{mnist_cnn_forward.1} parent=1 // pred_fallthru
      _
    // Predicated region
    $region38: #{mnist_cnn_forward.1} parent=1 // pred_check
      _
    $region39: #{mnist_cnn_forward.1} parent=1 // pred_check_branch
      %36 = sbr.rel (0) target = $region41
    $region40: #{mnist_cnn_forward.1} parent=1 // pred_region
      _
    $region41: #{mnist_cnn_forward.1} parent=1 // pred_fallthru
      _
    // Predicated region
    $region42: #{mnist_cnn_forward.1} parent=1 // pred_check
      _
    $region43: #{mnist_cnn_forward.1} parent=1 // pred_check_branch
      %38 = sbr.rel (0) target = $region45
    $region44: #{mnist_cnn_forward.1} parent=1 // pred_region
      _
    $region45: #{mnist_cnn_forward.1} parent=1 // pred_fallthru
      _
    %v39 = vld [vmem:[%s0] sm:$0xff]
    %v40 = vld [vmem:[%s0 + $0x8] sm:$0xff]
    %v41 = vld [vmem:[%s0 + $0x10] sm:$0xff]
    %v42 = vld [vmem:[%s0 + $0x20] sm:$0xff]
    %v43 = vld [vmem:[%s0 + $0x28] sm:$0xff]
    %v44 = vld [vmem:[%s0 + $0x30] sm:$0xff]
    %v45 = vld [vmem:[%s1] sm:$0xff]
    %v46 = vld [vmem:[%s1 + $0x8] sm:$0xff]
    %v47 = vld [vmem:[%s1 + $0x10] sm:$0xff]
    %v48 = vld [vmem:[%s1 + $0x18] sm:$0xff]
    %v49 = vld [vmem:[%s1 + $0x20] sm:$0xff]
    %v50 = vld [vmem:[%s1 + $0x28] sm:$0xff]
    %v51 = vld [vmem:[%s1 + $0x30] sm:$0xf]
    %v52 = vld [vmem:[%s1 + $0x38] sm:$0xf]
    %v53 = vld [vmem:[%s0 + $0x1] sm:$0xff]
    %v54 = vld [vmem:[%s0 + $0x9] sm:$0xff]
    %v55 = vld [vmem:[%s0 + $0x11] sm:$0xff]
    %v56 = vld [vmem:[%s0 + $0x21] sm:$0xff]
    %v57 = vld [vmem:[%s0 + $0x29] sm:$0xff]
    %v58 = vld [vmem:[%s0 + $0x31] sm:$0xff]
    %s59 = scalar_lea.vmem %s1, 64
    %v60 = vld [vmem:[%s59] sm:$0xff]
    %v61 = vld [vmem:[%s59 + $0x8] sm:$0xff]
    %v62 = vld [vmem:[%s59 + $0x10] sm:$0xff]
    %v63 = vld [vmem:[%s59 + $0x18] sm:$0xff]
    %v64 = vld [vmem:[%s59 + $0x20] sm:$0xff]
    %v65 = vld [vmem:[%s59 + $0x28] sm:$0xff]
    %v66 = vld [vmem:[%s59 + $0x30] sm:$0xf]
    %v67 = vld [vmem:[%s59 + $0x38] sm:$0xf]
    %vm68 = vcmask 228352
    %v70 = vsel %vm68, %v53, 0
    %v73 = vsel %vm68, %v54, 0
    %v76 = vsel %vm68, %v55, 0
    %v79 = vsel %vm68, %v56, 0
    %v82 = vsel %vm68, %v57, 0
    %v85 = vsel %vm68, %v58, 0
    %vm87 = vcmask 1043456
    %v89 = vsel %vm87, %v66, 0
    %v92 = vsel %vm87, %v67, 0
    %94 = vmatprep.subr.mxu0 %v61
    %95 = vmatpush1.msra.mxu0 %v60
    %96 = vmatprep.subr.mxu0 %v63
    %97 = vmatpush1.msra.mxu0 %v62
    %98 = vmatprep.subr.mxu0 %v65
    %99 = vmatpush1.msra.mxu0 %v64
    %100 = vmatprep.subr.mxu0 %v92
    %101 = vmatpush1.msra.mxu0 %v89
    %102 = vmatprep.subr.mxu0 0.0
    %103 = vmatpush1.msra.mxu0 0.0
    %104 = vmatprep.subr.mxu0 0.0
    %105 = vmatpush1.msra.mxu0 0.0
    %106 = vmatprep.subr.mxu0 0.0
    %107 = vmatpush1.msra.mxu0 0.0
    %108 = vmatprep.subr.mxu0 0.0
    %109 = vmatpush1.msra.mxu0 0.0
    %110 = vmatprep.subr.mxu0 0.0
    %111 = vmatpush1.msra.mxu0 0.0
    %112 = vmatprep.subr.mxu0 0.0
    %113 = vmatpush1.msra.mxu0 0.0
    %114 = vmatprep.subr.mxu0 0.0
    %115 = vmatpush1.msra.mxu0 0.0
    %116 = vmatprep.subr.mxu0 0.0
    %117 = vmatpush1.msra.mxu0 0.0
    %118 = vmatprep.subr.mxu0 0.0
    %119 = vmatpush1.msra.mxu0 0.0
    %120 = vmatprep.subr.mxu0 0.0
    %121 = vmatpush1.msra.mxu0 0.0
    %122 = vmatprep.subr.mxu0 0.0
    %123 = vmatpush1.msra.mxu0 0.0
    %124 = vmatprep.subr.mxu0 0.0
    %125 = vmatpush1.msra.mxu0 0.0
    %126 = vmatprep.subr.mxu0 0.0
    %127 = vmatpush1.msra.mxu0 0.0
    %128 = vmatprep.subr.mxu0 0.0
    %129 = vmatpush1.msra.mxu0 0.0
    %130 = vmatprep.subr.mxu0 0.0
    %131 = vmatpush1.msra.mxu0 0.0
    %132 = vmatprep.subr.mxu0 0.0
    %133 = vmatpush1.msra.mxu0 0.0
    %134 = vmatprep.subr.mxu0 0.0
    %135 = vmatpush1.msra.mxu0 0.0
    %136 = vmatprep.subr.mxu0 0.0
    %137 = vmatpush1.msra.mxu0 0.0
    %138 = vmatprep.subr.mxu0 0.0
    %139 = vmatpush1.msra.mxu0 0.0
    %140 = vmatprep.subr.mxu0 0.0
    %141 = vmatpush1.msra.mxu0 0.0
    %142 = vmatprep.subr.mxu0 0.0
    %143 = vmatpush1.msra.mxu0 0.0
    %144 = vmatprep.subr.mxu0 0.0
    %145 = vmatpush1.msra.mxu0 0.0
    %146 = vmatprep.subr.mxu0 0.0
    %147 = vmatpush1.msra.mxu0 0.0
    %148 = vmatprep.subr.mxu0 0.0
    %149 = vmatpush1.msra.mxu0 0.0
    %150 = vmatprep.subr.mxu0 0.0
    %151 = vmatpush1.msra.mxu0 0.0
    %152 = vmatprep.subr.mxu0 0.0
    %153 = vmatpush1.msra.mxu0 0.0
    %154 = vmatprep.subr.mxu0 0.0
    %155 = vmatpush1.msra.mxu0 0.0
    %156 = vmatprep.subr.mxu0 0.0
    %157 = vmatpush1.msra.mxu0 0.0
    %158 = vmatprep.mubr.f32.mxu0 0.0
    %159 = vmatmul.mubr.f32.gmra.mrb[0].mxu0 %v70
    %v160 = vpop.f32.mrb[0].mxu0
    %v161 = vadd.f32 0.0, %v160
    %v162 = vpop.f32.mrb[0].mxu0
    %v163 = vadd.f32 0.0, %v162
    %164 = vmatprep.mubr.f32.mxu0 0.0
    %165 = vmatmul.mubr.f32.gmra.mrb[0].mxu0 %v73
    %v166 = vpop.f32.mrb[0].mxu0
    %v167 = vadd.f32 0.0, %v166
    %v168 = vpop.f32.mrb[0].mxu0
    %v169 = vadd.f32 0.0, %v168
    %170 = vmatprep.mubr.f32.mxu0 0.0
    %171 = vmatmul.mubr.f32.gmra.mrb[0].mxu0 %v76
    %v172 = vpop.f32.mrb[0].mxu0
    %v173 = vadd.f32 0.0, %v172
    %v174 = vpop.f32.mrb[0].mxu0
    %v175 = vadd.f32 0.0, %v174
    %176 = vmatprep.mubr.f32.mxu0 0.0
    %177 = vmatmul.mubr.f32.gmra.mrb[0].mxu0 %v79
    %v178 = vpop.f32.mrb[0].mxu0
    %v179 = vadd.f32 0.0, %v178
    %v180 = vpop.f32.mrb[0].mxu0
    %v181 = vadd.f32 0.0, %v180
    %182 = vmatprep.mubr.f32.mxu0 0.0
    %183 = vmatmul.mubr.f32.gmra.mrb[0].mxu0 %v82
    %v184 = vpop.f32.mrb[0].mxu0
    %v185 = vadd.f32 0.0, %v184
    %v186 = vpop.f32.mrb[0].mxu0
    %v187 = vadd.f32 0.0, %v186
    %188 = vmatprep.mubr.f32.mxu0 0.0
    %189 = vmatmul.mubr.f32.gmra.mrb[0].mxu0 %v85
    %v190 = vpop.f32.mrb[0].mxu0
    %v191 = vadd.f32 0.0, %v190
    %v192 = vpop.f32.mrb[0].mxu0
    %v193 = vadd.f32 0.0, %v192
    %194 = vdwg.mxu0
    %v196 = vsel %vm68, %v39, 0
    %v199 = vsel %vm68, %v40, 0
    %v202 = vsel %vm68, %v41, 0
    %v205 = vsel %vm68, %v42, 0
    %v208 = vsel %vm68, %v43, 0
    %v211 = vsel %vm68, %v44, 0
    %v214 = vsel %vm87, %v51, 0
    %v217 = vsel %vm87, %v52, 0
    %219 = vmatprep.subr.mxu0 %v46
    %220 = vmatpush1.msra.mxu0 %v45
    %221 = vmatprep.subr.mxu0 %v48
    %222 = vmatpush1.msra.mxu0 %v47
    %223 = vmatprep.subr.mxu0 %v50
    %224 = vmatpush1.msra.mxu0 %v49
    %225 = vmatprep.subr.mxu0 %v217
    %226 = vmatpush1.msra.mxu0 %v214
    %227 = vmatprep.subr.mxu0 0.0
    %228 = vmatpush1.msra.mxu0 0.0
    %229 = vmatprep.subr.mxu0 0.0
    %230 = vmatpush1.msra.mxu0 0.0
    %231 = vmatprep.subr.mxu0 0.0
    %232 = vmatpush1.msra.mxu0 0.0
    %233 = vmatprep.subr.mxu0 0.0
    %234 = vmatpush1.msra.mxu0 0.0
    %235 = vmatprep.subr.mxu0 0.0
    %236 = vmatpush1.msra.mxu0 0.0
    %237 = vmatprep.subr.mxu0 0.0
    %238 = vmatpush1.msra.mxu0 0.0
    %239 = vmatprep.subr.mxu0 0.0
    %240 = vmatpush1.msra.mxu0 0.0
    %241 = vmatprep.subr.mxu0 0.0
    %242 = vmatpush1.msra.mxu0 0.0
    %243 = vmatprep.subr.mxu0 0.0
    %244 = vmatpush1.msra.mxu0 0.0
    %245 = vmatprep.subr.mxu0 0.0
    %246 = vmatpush1.msra.mxu0 0.0
    %247 = vmatprep.subr.mxu0 0.0
    %248 = vmatpush1.msra.mxu0 0.0
    %249 = vmatprep.subr.mxu0 0.0
    %250 = vmatpush1.msra.mxu0 0.0
    %251 = vmatprep.subr.mxu0 0.0
    %252 = vmatpush1.msra.mxu0 0.0
    %253 = vmatprep.subr.mxu0 0.0
    %254 = vmatpush1.msra.mxu0 0.0
    %255 = vmatprep.subr.mxu0 0.0
    %256 = vmatpush1.msra.mxu0 0.0
    %257 = vmatprep.subr.mxu0 0.0
    %258 = vmatpush1.msra.mxu0 0.0
    %259 = vmatprep.subr.mxu0 0.0
    %260 = vmatpush1.msra.mxu0 0.0
    %261 = vmatprep.subr.mxu0 0.0
    %262 = vmatpush1.msra.mxu0 0.0
    %263 = vmatprep.subr.mxu0 0.0
    %264 = vmatpush1.msra.mxu0 0.0
    %265 = vmatprep.subr.mxu0 0.0
    %266 = vmatpush1.msra.mxu0 0.0
    %267 = vmatprep.subr.mxu0 0.0
    %268 = vmatpush1.msra.mxu0 0.0
    %269 = vmatprep.subr.mxu0 0.0
    %270 = vmatpush1.msra.mxu0 0.0
    %271 = vmatprep.subr.mxu0 0.0
    %272 = vmatpush1.msra.mxu0 0.0
    %273 = vmatprep.subr.mxu0 0.0
    %274 = vmatpush1.msra.mxu0 0.0
    %275 = vmatprep.subr.mxu0 0.0
    %276 = vmatpush1.msra.mxu0 0.0
    %277 = vmatprep.subr.mxu0 0.0
    %278 = vmatpush1.msra.mxu0 0.0
    %279 = vmatprep.subr.mxu0 0.0
    %280 = vmatpush1.msra.mxu0 0.0
    %281 = vmatprep.subr.mxu0 0.0
    %282 = vmatpush1.msra.mxu0 0.0
    %283 = vmatprep.mubr.f32.mxu0 0.0
    %284 = vmatmul.mubr.f32.gmra.mrb[0].mxu0 %v196
    %v285 = vpop.f32.mrb[0].mxu0
    %v286 = vadd.f32 %v161, %v285
    %v287 = vpop.f32.mrb[0].mxu0
    %v288 = vadd.f32 %v163, %v287
    %289 = vmatprep.mubr.f32.mxu0 0.0
    %290 = vmatmul.mubr.f32.gmra.mrb[0].mxu0 %v199
    %v291 = vpop.f32.mrb[0].mxu0
    %v292 = vadd.f32 %v167, %v291
    %v293 = vpop.f32.mrb[0].mxu0
    %v294 = vadd.f32 %v169, %v293
    %295 = vmatprep.mubr.f32.mxu0 0.0
    %296 = vmatmul.mubr.f32.gmra.mrb[0].mxu0 %v202
    %v297 = vpop.f32.mrb[0].mxu0
    %v298 = vadd.f32 %v173, %v297
    %v299 = vpop.f32.mrb[0].mxu0
    %v300 = vadd.f32 %v175, %v299
    %301 = vmatprep.mubr.f32.mxu0 0.0
    %302 = vmatmul.mubr.f32.gmra.mrb[0].mxu0 %v205
    %v303 = vpop.f32.mrb[0].mxu0
    %v304 = vadd.f32 %v179, %v303
    %v305 = vpop.f32.mrb[0].mxu0
    %v306 = vadd.f32 %v181, %v305
    %307 = vmatprep.mubr.f32.mxu0 0.0
    %308 = vmatmul.mubr.f32.gmra.mrb[0].mxu0 %v208
    %v309 = vpop.f32.mrb[0].mxu0
    %v310 = vadd.f32 %v185, %v309
    %v311 = vpop.f32.mrb[0].mxu0
    %v312 = vadd.f32 %v187, %v311
    %313 = vmatprep.mubr.f32.mxu0 0.0
    %314 = vmatmul.mubr.f32.gmra.mrb[0].mxu0 %v211
    %v315 = vpop.f32.mrb[0].mxu0
    %v316 = vadd.f32 %v191, %v315
    %v317 = vpop.f32.mrb[0].mxu0
    %v318 = vadd.f32 %v193, %v317
    %319 = vdwg.mxu0
    %v320 = vld [vmem:[%s0 + $0x2] sm:$0xff]
    %v321 = vld [vmem:[%s0 + $0xa] sm:$0xff]
    %v322 = vld [vmem:[%s0 + $0x12] sm:$0xff]
    %v323 = vld [vmem:[%s0 + $0x22] sm:$0xff]
    %v324 = vld [vmem:[%s0 + $0x2a] sm:$0xff]
    %v325 = vld [vmem:[%s0 + $0x32] sm:$0xff]
    %s326 = scalar_lea.vmem %s1, 128
    %v327 = vld [vmem:[%s326] sm:$0xff]
    %v328 = vld [vmem:[%s326 + $0x8] sm:$0xff]
    %v329 = vld [vmem:[%s326 + $0x10] sm:$0xff]
    %v330 = vld [vmem:[%s326 + $0x18] sm:$0xff]
    %v331 = vld [vmem:[%s326 + $0x20] sm:$0xff]
    %v332 = vld [vmem:[%s326 + $0x28] sm:$0xff]
    %v333 = vld [vmem:[%s326 + $0x30] sm:$0xf]
    %v334 = vld [vmem:[%s326 + $0x38] sm:$0xf]
    %v336 = vsel %vm68, %v320, 0
    %v339 = vsel %vm68, %v321, 0
    %v342 = vsel %vm68, %v322, 0
    %v345 = vsel %vm68, %v323, 0
    %v348 = vsel %vm68, %v324, 0
    %v351 = vsel %vm68, %v325, 0
    %v354 = vsel %vm87, %v333, 0
    %v357 = vsel %vm87, %v334, 0
    %359 = vmatprep.subr.mxu0 %v328
    %360 = vmatpush1.msra.mxu0 %v327
    %361 = vmatprep.subr.mxu0 %v330
    %362 = vmatpush1.msra.mxu0 %v329
    %363 = vmatprep.subr.mxu0 %v332
    %364 = vmatpush1.msra.mxu0 %v331
    %365 = vmatprep.subr.mxu0 %v357
    %366 = vmatpush1.msra.mxu0 %v354
    %367 = vmatprep.subr.mxu0 0.0
    %368 = vmatpush1.msra.mxu0 0.0
    %369 = vmatprep.subr.mxu0 0.0
    %370 = vmatpush1.msra.mxu0 0.0
    %371 = vmatprep.subr.mxu0 0.0
    %372 = vmatpush1.msra.mxu0 0.0
    %373 = vmatprep.subr.mxu0 0.0
    %374 = vmatpush1.msra.mxu0 0.0
    %375 = vmatprep.subr.mxu0 0.0
    %376 = vmatpush1.msra.mxu0 0.0
    %377 = vmatprep.subr.mxu0 0.0
    %378 = vmatpush1.msra.mxu0 0.0
    %379 = vmatprep.subr.mxu0 0.0
    %380 = vmatpush1.msra.mxu0 0.0
    %381 = vmatprep.subr.mxu0 0.0
    %382 = vmatpush1.msra.mxu0 0.0
    %383 = vmatprep.subr.mxu0 0.0
    %384 = vmatpush1.msra.mxu0 0.0
    %385 = vmatprep.subr.mxu0 0.0
    %386 = vmatpush1.msra.mxu0 0.0
    %387 = vmatprep.subr.mxu0 0.0
    %388 = vmatpush1.msra.mxu0 0.0
    %389 = vmatprep.subr.mxu0 0.0
    %390 = vmatpush1.msra.mxu0 0.0
    %391 = vmatprep.subr.mxu0 0.0
    %392 = vmatpush1.msra.mxu0 0.0
    %393 = vmatprep.subr.mxu0 0.0
    %394 = vmatpush1.msra.mxu0 0.0
    %395 = vmatprep.subr.mxu0 0.0
    %396 = vmatpush1.msra.mxu0 0.0
    %397 = vmatprep.subr.mxu0 0.0
    %398 = vmatpush1.msra.mxu0 0.0
    %399 = vmatprep.subr.mxu0 0.0
    %400 = vmatpush1.msra.mxu0 0.0
    %401 = vmatprep.subr.mxu0 0.0
    %402 = vmatpush1.msra.mxu0 0.0
    %403 = vmatprep.subr.mxu0 0.0
    %404 = vmatpush1.msra.mxu0 0.0
    %405 = vmatprep.subr.mxu0 0.0
    %406 = vmatpush1.msra.mxu0 0.0
    %407 = vmatprep.subr.mxu0 0.0
    %408 = vmatpush1.msra.mxu0 0.0
    %409 = vmatprep.subr.mxu0 0.0
    %410 = vmatpush1.msra.mxu0 0.0
    %411 = vmatprep.subr.mxu0 0.0
    %412 = vmatpush1.msra.mxu0 0.0
    %413 = vmatprep.subr.mxu0 0.0
    %414 = vmatpush1.msra.mxu0 0.0
    %415 = vmatprep.subr.mxu0 0.0
    %416 = vmatpush1.msra.mxu0 0.0
    %417 = vmatprep.subr.mxu0 0.0
    %418 = vmatpush1.msra.mxu0 0.0
    %419 = vmatprep.subr.mxu0 0.0
    %420 = vmatpush1.msra.mxu0 0.0
    %421 = vmatprep.subr.mxu0 0.0
    %422 = vmatpush1.msra.mxu0 0.0
    %423 = vmatprep.mubr.f32.mxu0 0.0
    %424 = vmatmul.mubr.f32.gmra.mrb[0].mxu0 %v336
    %v425 = vpop.f32.mrb[0].mxu0
    %v426 = vadd.f32 0.0, %v425
    %v427 = vpop.f32.mrb[0].mxu0
    %v428 = vadd.f32 0.0, %v427
    %429 = vmatprep.mubr.f32.mxu0 0.0
    %430 = vmatmul.mubr.f32.gmra.mrb[0].mxu0 %v339
    %v431 = vpop.f32.mrb[0].mxu0
    %v432 = vadd.f32 0.0, %v431
    %v433 = vpop.f32.mrb[0].mxu0
    %v434 = vadd.f32 0.0, %v433
    %435 = vmatprep.mubr.f32.mxu0 0.0
    %436 = vmatmul.mubr.f32.gmra.mrb[0].mxu0 %v342
    %v437 = vpop.f32.mrb[0].mxu0
    %v438 = vadd.f32 0.0, %v437
    %v439 = vpop.f32.mrb[0].mxu0
    %v440 = vadd.f32 0.0, %v439
    %441 = vmatprep.mubr.f32.mxu0 0.0
    %442 = vmatmul.mubr.f32.gmra.mrb[0].mxu0 %v345
    %v443 = vpop.f32.mrb[0].mxu0
    %v444 = vadd.f32 0.0, %v443
    %v445 = vpop.f32.mrb[0].mxu0
    %v446 = vadd.f32 0.0, %v445
    %447 = vmatprep.mubr.f32.mxu0 0.0
    %448 = vmatmul.mubr.f32.gmra.mrb[0].mxu0 %v348
    %v449 = vpop.f32.mrb[0].mxu0
    %v450 = vadd.f32 0.0, %v449
    %v451 = vpop.f32.mrb[0].mxu0
    %v452 = vadd.f32 0.0, %v451
    %453 = vmatprep.mubr.f32.mxu0 0.0
    %454 = vmatmul.mubr.f32.gmra.mrb[0].mxu0 %v351
    %v455 = vpop.f32.mrb[0].mxu0
    %v456 = vadd.f32 0.0, %v455
    %v457 = vpop.f32.mrb[0].mxu0
    %v458 = vadd.f32 0.0, %v457
    %459 = vdwg.mxu0
    %v460 = vadd.f32 %v286, %v426
    %v461 = vadd.f32 %v288, %v428
    %v462 = vadd.f32 %v292, %v432
    %v463 = vadd.f32 %v294, %v434
    %v464 = vadd.f32 %v298, %v438
    %v465 = vadd.f32 %v300, %v440
    %v466 = vadd.f32 %v304, %v444
    %v467 = vadd.f32 %v306, %v446
    %v468 = vadd.f32 %v310, %v450
    %v469 = vadd.f32 %v312, %v452
    %v470 = vadd.f32 %v316, %v456
    %v471 = vadd.f32 %v318, %v458
    %v472 = vld [vmem:[%s0 + $0x3] sm:$0xff]
    %v473 = vld [vmem:[%s0 + $0xb] sm:$0xff]
    %v474 = vld [vmem:[%s0 + $0x13] sm:$0xff]
    %v475 = vld [vmem:[%s0 + $0x23] sm:$0xff]
    %v476 = vld [vmem:[%s0 + $0x2b] sm:$0xff]
    %v477 = vld [vmem:[%s0 + $0x33] sm:$0xff]
    %s478 = scalar_lea.vmem %s1, 192
    %v479 = vld [vmem:[%s478] sm:$0xff]
    %v480 = vld [vmem:[%s478 + $0x8] sm:$0xff]
    %v481 = vld [vmem:[%s478 + $0x10] sm:$0xff]
    %v482 = vld [vmem:[%s478 + $0x18] sm:$0xff]
    %v483 = vld [vmem:[%s478 + $0x20] sm:$0xff]
    %v484 = vld [vmem:[%s478 + $0x28] sm:$0xff]
    %v485 = vld [vmem:[%s478 + $0x30] sm:$0xf]
    %v486 = vld [vmem:[%s478 + $0x38] sm:$0xf]
    %v488 = vsel %vm68, %v472, 0
    %v491 = vsel %vm68, %v473, 0
    %v494 = vsel %vm68, %v474, 0
    %v497 = vsel %vm68, %v475, 0
    %v500 = vsel %vm68, %v476, 0
    %v503 = vsel %vm68, %v477, 0
    %v506 = vsel %vm87, %v485, 0
    %v509 = vsel %vm87, %v486, 0
    %511 = vmatprep.subr.mxu0 %v480
    %512 = vmatpush1.msra.mxu0 %v479
    %513 = vmatprep.subr.mxu0 %v482
    %514 = vmatpush1.msra.mxu0 %v481
    %515 = vmatprep.subr.mxu0 %v484
    %516 = vmatpush1.msra.mxu0 %v483
    %517 = vmatprep.subr.mxu0 %v509
    %518 = vmatpush1.msra.mxu0 %v506
    %519 = vmatprep.subr.mxu0 0.0
    %520 = vmatpush1.msra.mxu0 0.0
    %521 = vmatprep.subr.mxu0 0.0
    %522 = vmatpush1.msra.mxu0 0.0
    %523 = vmatprep.subr.mxu0 0.0
    %524 = vmatpush1.msra.mxu0 0.0
    %525 = vmatprep.subr.mxu0 0.0
    %526 = vmatpush1.msra.mxu0 0.0
    %527 = vmatprep.subr.mxu0 0.0
    %528 = vmatpush1.msra.mxu0 0.0
    %529 = vmatprep.subr.mxu0 0.0
    %530 = vmatpush1.msra.mxu0 0.0
    %531 = vmatprep.subr.mxu0 0.0
    %532 = vmatpush1.msra.mxu0 0.0
    %533 = vmatprep.subr.mxu0 0.0
    %534 = vmatpush1.msra.mxu0 0.0
    %535 = vmatprep.subr.mxu0 0.0
    %536 = vmatpush1.msra.mxu0 0.0
    %537 = vmatprep.subr.mxu0 0.0
    %538 = vmatpush1.msra.mxu0 0.0
    %539 = vmatprep.subr.mxu0 0.0
    %540 = vmatpush1.msra.mxu0 0.0
    %541 = vmatprep.subr.mxu0 0.0
    %542 = vmatpush1.msra.mxu0 0.0
    %543 = vmatprep.subr.mxu0 0.0
    %544 = vmatpush1.msra.mxu0 0.0
    %545 = vmatprep.subr.mxu0 0.0
    %546 = vmatpush1.msra.mxu0 0.0
    %547 = vmatprep.subr.mxu0 0.0
    %548 = vmatpush1.msra.mxu0 0.0
    %549 = vmatprep.subr.mxu0 0.0
    %550 = vmatpush1.msra.mxu0 0.0
    %551 = vmatprep.subr.mxu0 0.0
    %552 = vmatpush1.msra.mxu0 0.0
    %553 = vmatprep.subr.mxu0 0.0
    %554 = vmatpush1.msra.mxu0 0.0
    %555 = vmatprep.subr.mxu0 0.0
    %556 = vmatpush1.msra.mxu0 0.0
    %557 = vmatprep.subr.mxu0 0.0
    %558 = vmatpush1.msra.mxu0 0.0
    %559 = vmatprep.subr.mxu0 0.0
    %560 = vmatpush1.msra.mxu0 0.0
    %561 = vmatprep.subr.mxu0 0.0
    %562 = vmatpush1.msra.mxu0 0.0
    %563 = vmatprep.subr.mxu0 0.0
    %564 = vmatpush1.msra.mxu0 0.0
    %565 = vmatprep.subr.mxu0 0.0
    %566 = vmatpush1.msra.mxu0 0.0
    %567 = vmatprep.subr.mxu0 0.0
    %568 = vmatpush1.msra.mxu0 0.0
    %569 = vmatprep.subr.mxu0 0.0
    %570 = vmatpush1.msra.mxu0 0.0
    %571 = vmatprep.subr.mxu0 0.0
    %572 = vmatpush1.msra.mxu0 0.0
    %573 = vmatprep.subr.mxu0 0.0
    %574 = vmatpush1.msra.mxu0 0.0
    %575 = vmatprep.mubr.f32.mxu0 0.0
    %576 = vmatmul.mubr.f32.gmra.mrb[0].mxu0 %v488
    %v577 = vpop.f32.mrb[0].mxu0
    %v578 = vadd.f32 0.0, %v577
    %v579 = vpop.f32.mrb[0].mxu0
    %v580 = vadd.f32 0.0, %v579
    %581 = vmatprep.mubr.f32.mxu0 0.0
    %582 = vmatmul.mubr.f32.gmra.mrb[0].mxu0 %v491
    %v583 = vpop.f32.mrb[0].mxu0
    %v584 = vadd.f32 0.0, %v583
    %v585 = vpop.f32.mrb[0].mxu0
    %v586 = vadd.f32 0.0, %v585
    %587 = vmatprep.mubr.f32.mxu0 0.0
    %588 = vmatmul.mubr.f32.gmra.mrb[0].mxu0 %v494
    %v589 = vpop.f32.mrb[0].mxu0
    %v590 = vadd.f32 0.0, %v589
    %v591 = vpop.f32.mrb[0].mxu0
    %v592 = vadd.f32 0.0, %v591
    %593 = vmatprep.mubr.f32.mxu0 0.0
    %594 = vmatmul.mubr.f32.gmra.mrb[0].mxu0 %v497
    %v595 = vpop.f32.mrb[0].mxu0
    %v596 = vadd.f32 0.0, %v595
    %v597 = vpop.f32.mrb[0].mxu0
    %v598 = vadd.f32 0.0, %v597
    %599 = vmatprep.mubr.f32.mxu0 0.0
    %600 = vmatmul.mubr.f32.gmra.mrb[0].mxu0 %v500
    %v601 = vpop.f32.mrb[0].mxu0
    %v602 = vadd.f32 0.0, %v601
    %v603 = vpop.f32.mrb[0].mxu0
    %v604 = vadd.f32 0.0, %v603
    %605 = vmatprep.mubr.f32.mxu0 0.0
    %606 = vmatmul.mubr.f32.gmra.mrb[0].mxu0 %v503
    %v607 = vpop.f32.mrb[0].mxu0
    %v608 = vadd.f32 0.0, %v607
    %v609 = vpop.f32.mrb[0].mxu0
    %v610 = vadd.f32 0.0, %v609
    %611 = vdwg.mxu0
    %v612 = vadd.f32 %v460, %v578
    %v613 = vadd.f32 %v461, %v580
    %v614 = vadd.f32 %v462, %v584
    %v615 = vadd.f32 %v463, %v586
    %v616 = vadd.f32 %v464, %v590
    %v617 = vadd.f32 %v465, %v592
    %v618 = vadd.f32 %v466, %v596
    %v619 = vadd.f32 %v467, %v598
    %v620 = vadd.f32 %v468, %v602
    %v621 = vadd.f32 %v469, %v604
    %v622 = vadd.f32 %v470, %v608
    %v623 = vadd.f32 %v471, %v610
    %v624 = vld [vmem:[%s0 + $0x4] sm:$0xff]
    %v625 = vld [vmem:[%s0 + $0xc] sm:$0xff]
    %v626 = vld [vmem:[%s0 + $0x14] sm:$0xff]
    %v627 = vld [vmem:[%s0 + $0x24] sm:$0xff]
    %v628 = vld [vmem:[%s0 + $0x2c] sm:$0xff]
    %v629 = vld [vmem:[%s0 + $0x34] sm:$0xff]
    %s630 = scalar_lea.vmem %s1, 256
    %v631 = vld [vmem:[%s630] sm:$0xff]
    %v632 = vld [vmem:[%s630 + $0x8] sm:$0xff]
    %v633 = vld [vmem:[%s630 + $0x10] sm:$0xff]
    %v634 = vld [vmem:[%s630 + $0x18] sm:$0xff]
    %v635 = vld [vmem:[%s630 + $0x20] sm:$0xff]
    %v636 = vld [vmem:[%s630 + $0x28] sm:$0xff]
    %v637 = vld [vmem:[%s630 + $0x30] sm:$0xf]
    %v638 = vld [vmem:[%s630 + $0x38] sm:$0xf]
    %v640 = vsel %vm68, %v624, 0
    %v643 = vsel %vm68, %v625, 0
    %v646 = vsel %vm68, %v626, 0
    %v649 = vsel %vm68, %v627, 0
    %v652 = vsel %vm68, %v628, 0
    %v655 = vsel %vm68, %v629, 0
    %v658 = vsel %vm87, %v637, 0
    %v661 = vsel %vm87, %v638, 0
    %663 = vmatprep.subr.mxu0 %v632
    %664 = vmatpush1.msra.mxu0 %v631
    %665 = vmatprep.subr.mxu0 %v634
    %666 = vmatpush1.msra.mxu0 %v633
    %667 = vmatprep.subr.mxu0 %v636
    %668 = vmatpush1.msra.mxu0 %v635
    %669 = vmatprep.subr.mxu0 %v661
    %670 = vmatpush1.msra.mxu0 %v658
    %671 = vmatprep.subr.mxu0 0.0
    %672 = vmatpush1.msra.mxu0 0.0
    %673 = vmatprep.subr.mxu0 0.0
    %674 = vmatpush1.msra.mxu0 0.0
    %675 = vmatprep.subr.mxu0 0.0
    %676 = vmatpush1.msra.mxu0 0.0
    %677 = vmatprep.subr.mxu0 0.0
    %678 = vmatpush1.msra.mxu0 0.0
    %679 = vmatprep.subr.mxu0 0.0
    %680 = vmatpush1.msra.mxu0 0.0
    %681 = vmatprep.subr.mxu0 0.0
    %682 = vmatpush1.msra.mxu0 0.0
    %683 = vmatprep.subr.mxu0 0.0
    %684 = vmatpush1.msra.mxu0 0.0
    %685 = vmatprep.subr.mxu0 0.0
    %686 = vmatpush1.msra.mxu0 0.0
    %687 = vmatprep.subr.mxu0 0.0
    %688 = vmatpush1.msra.mxu0 0.0
    %689 = vmatprep.subr.mxu0 0.0
    %690 = vmatpush1.msra.mxu0 0.0
    %691 = vmatprep.subr.mxu0 0.0
    %692 = vmatpush1.msra.mxu0 0.0
    %693 = vmatprep.subr.mxu0 0.0
    %694 = vmatpush1.msra.mxu0 0.0
    %695 = vmatprep.subr.mxu0 0.0
    %696 = vmatpush1.msra.mxu0 0.0
    %697 = vmatprep.subr.mxu0 0.0
    %698 = vmatpush1.msra.mxu0 0.0
    %699 = vmatprep.subr.mxu0 0.0
    %700 = vmatpush1.msra.mxu0 0.0
    %701 = vmatprep.subr.mxu0 0.0
    %702 = vmatpush1.msra.mxu0 0.0
    %703 = vmatprep.subr.mxu0 0.0
    %704 = vmatpush1.msra.mxu0 0.0
    %705 = vmatprep.subr.mxu0 0.0
    %706 = vmatpush1.msra.mxu0 0.0
    %707 = vmatprep.subr.mxu0 0.0
    %708 = vmatpush1.msra.mxu0 0.0
    %709 = vmatprep.subr.mxu0 0.0
    %710 = vmatpush1.msra.mxu0 0.0
    %711 = vmatprep.subr.mxu0 0.0
    %712 = vmatpush1.msra.mxu0 0.0
    %713 = vmatprep.subr.mxu0 0.0
    %714 = vmatpush1.msra.mxu0 0.0
    %715 = vmatprep.subr.mxu0 0.0
    %716 = vmatpush1.msra.mxu0 0.0
    %717 = vmatprep.subr.mxu0 0.0
    %718 = vmatpush1.msra.mxu0 0.0
    %719 = vmatprep.subr.mxu0 0.0
    %720 = vmatpush1.msra.mxu0 0.0
    %721 = vmatprep.subr.mxu0 0.0
    %722 = vmatpush1.msra.mxu0 0.0
    %723 = vmatprep.subr.mxu0 0.0
    %724 = vmatpush1.msra.mxu0 0.0
    %725 = vmatprep.subr.mxu0 0.0
    %726 = vmatpush1.msra.mxu0 0.0
    %727 = vmatprep.mubr.f32.mxu0 0.0
    %728 = vmatmul.mubr.f32.gmra.mrb[0].mxu0 %v640
    %v729 = vpop.f32.mrb[0].mxu0
    %v730 = vadd.f32 0.0, %v729
    %v731 = vpop.f32.mrb[0].mxu0
    %v732 = vadd.f32 0.0, %v731
    %733 = vmatprep.mubr.f32.mxu0 0.0
    %734 = vmatmul.mubr.f32.gmra.mrb[0].mxu0 %v643
    %v735 = vpop.f32.mrb[0].mxu0
    %v736 = vadd.f32 0.0, %v735
    %v737 = vpop.f32.mrb[0].mxu0
    %v738 = vadd.f32 0.0, %v737
    %739 = vmatprep.mubr.f32.mxu0 0.0
    %740 = vmatmul.mubr.f32.gmra.mrb[0].mxu0 %v646
    %v741 = vpop.f32.mrb[0].mxu0
    %v742 = vadd.f32 0.0, %v741
    %v743 = vpop.f32.mrb[0].mxu0
    %v744 = vadd.f32 0.0, %v743
    %745 = vmatprep.mubr.f32.mxu0 0.0
    %746 = vmatmul.mubr.f32.gmra.mrb[0].mxu0 %v649
    %v747 = vpop.f32.mrb[0].mxu0
    %v748 = vadd.f32 0.0, %v747
    %v749 = vpop.f32.mrb[0].mxu0
    %v750 = vadd.f32 0.0, %v749
    %751 = vmatprep.mubr.f32.mxu0 0.0
    %752 = vmatmul.mubr.f32.gmra.mrb[0].mxu0 %v652
    %v753 = vpop.f32.mrb[0].mxu0
    %v754 = vadd.f32 0.0, %v753
    %v755 = vpop.f32.mrb[0].mxu0
    %v756 = vadd.f32 0.0, %v755
    %757 = vmatprep.mubr.f32.mxu0 0.0
    %758 = vmatmul.mubr.f32.gmra.mrb[0].mxu0 %v655
    %v759 = vpop.f32.mrb[0].mxu0
    %v760 = vadd.f32 0.0, %v759
    %v761 = vpop.f32.mrb[0].mxu0
    %v762 = vadd.f32 0.0, %v761
    %763 = vdwg.mxu0
    %v764 = vadd.f32 %v612, %v730
    %v765 = vadd.f32 %v613, %v732
    %v766 = vadd.f32 %v614, %v736
    %v767 = vadd.f32 %v615, %v738
    %v768 = vadd.f32 %v616, %v742
    %v769 = vadd.f32 %v617, %v744
    %v770 = vadd.f32 %v618, %v748
    %v771 = vadd.f32 %v619, %v750
    %v772 = vadd.f32 %v620, %v754
    %v773 = vadd.f32 %v621, %v756
    %v774 = vadd.f32 %v622, %v760
    %v775 = vadd.f32 %v623, %v762
    %v776 = vmax.f32 %v764, %v765
    %v777 = vmax.f32 %v766, %v767
    %v778 = vmax.f32 %v768, %v769
    %v779 = vmax.f32 %v770, %v771
    %v780 = vmax.f32 %v772, %v773
    %v781 = vmax.f32 %v774, %v775
    %782 = vst [vmem:[#allocation2] sm:$0xff] %v776
    %783 = vst [vmem:[#allocation2 + $0x8] sm:$0xff] %v777
    %784 = vst [vmem:[#allocation2 + $0x10] sm:$0xff] %v778
    %785 = vst [vmem:[#allocation2 + $0x18] sm:$0xff] %v779
    %786 = vst [vmem:[#allocation2 + $0x20] sm:$0xff] %v780
    %787 = vst [vmem:[#allocation2 + $0x28] sm:$0xff] %v781
    %v788 = vld [vmem:[#allocation2] ss:$2 sm:$0xff]
    %s789 = scalar_lea.vmem [#allocation2], 16
    %v790 = vld [vmem:[%s789] ss:$2 sm:$0xf]
    %s791 = scalar_lea.vmem [#allocation2], 24
    %v792 = vld [vmem:[%s791] ss:$2 sm:$0xff]
    %s793 = scalar_lea.vmem [#allocation2], 40
    %v794 = vld [vmem:[%s793] ss:$2 sm:$0xf]
    %s795 = scalar_lea.vmem [#allocation2], 1
    %v796 = vld [vmem:[%s795] ss:$2 sm:$0xff]
    %s797 = scalar_lea.vmem [#allocation2], 17
    %v798 = vld [vmem:[%s797] ss:$2 sm:$0xf]
    %s799 = scalar_lea.vmem [#allocation2], 25
    %v800 = vld [vmem:[%s799] ss:$2 sm:$0xff]
    %s801 = scalar_lea.vmem [#allocation2], 41
    %v802 = vld [vmem:[%s801] ss:$2 sm:$0xf]
    %v803 = vmax.f32 %v788, %v796
    %v804 = vmax.f32 %v790, %v798
    %v805 = vmax.f32 %v792, %v800
    %v806 = vmax.f32 %v794, %v802
    %v807 = vld [vmem:[%s2] sm:$0x1]
    %v809 = vlaneseq
    %v810 = vshrl.u32 %v809, 7
    %v811 = vsub.s32 0, %v810
    %v812 = vrot.slane %v807, %v811
    %v814 = vadd.f32 %v803, %v812
    %v815 = vadd.f32 %v804, %v812
    %v816 = vadd.f32 %v805, %v812
    %v817 = vadd.f32 %v806, %v812
    %v818 = vmax.f32 %v814, 0.0
    %v819 = vmax.f32 %v815, 0.0
    %v820 = vmax.f32 %v816, 0.0
    %v821 = vmax.f32 %v817, 0.0
    %822 = vst [vmem:[#allocation3] sm:$0xff] %v818
    %823 = vst [vmem:[#allocation3 + $0x8] sm:$0xf] %v819
    %824 = vst [vmem:[#allocation3 + $0x10] sm:$0xff] %v820
    %825 = vst [vmem:[#allocation3 + $0x18] sm:$0xf] %v821
    %v826 = vld [vmem:[#allocation3] sm:$0xff]
    %v827 = vld [vmem:[#allocation3 + $0x10] sm:$0xff]
    %v828 = vld [vmem:[%s3] sm:$0xff]
    %v829 = vld [vmem:[%s3 + $0x8] sm:$0xff]
    %v830 = vld [vmem:[%s3 + $0x10] sm:$0xff]
    %v831 = vld [vmem:[%s3 + $0x18] sm:$0xff]
    %v832 = vld [vmem:[%s3 + $0x20] sm:$0xff]
    %v833 = vld [vmem:[%s3 + $0x28] sm:$0xff]
    %v834 = vld [vmem:[%s3 + $0x30] sm:$0xff]
    %v835 = vld [vmem:[%s3 + $0x38] sm:$0xff]
    %v836 = vld [vmem:[%s3 + $0x40] sm:$0xff]
    %v837 = vld [vmem:[%s3 + $0x48] sm:$0xff]
    %v838 = vld [vmem:[%s3 + $0x50] sm:$0xff]
    %v839 = vld [vmem:[%s3 + $0x58] sm:$0xff]
    %v840 = vld [vmem:[%s3 + $0x60] sm:$0xff]
    %v841 = vld [vmem:[%s3 + $0x68] sm:$0xff]
    %v842 = vld [vmem:[%s3 + $0x70] sm:$0xff]
    %v843 = vld [vmem:[%s3 + $0x78] sm:$0xff]
    %v844 = vld [vmem:[%s3 + $0x80] sm:$0xff]
    %v845 = vld [vmem:[%s3 + $0x88] sm:$0xff]
    %v846 = vld [vmem:[%s3 + $0x90] sm:$0xff]
    %v847 = vld [vmem:[%s3 + $0x98] sm:$0xff]
    %v848 = vld [vmem:[%s3 + $0xa0] sm:$0xff]
    %v849 = vld [vmem:[%s3 + $0xa8] sm:$0xff]
    %v850 = vld [vmem:[%s3 + $0xb0] sm:$0xff]
    %v851 = vld [vmem:[%s3 + $0xb8] sm:$0xff]
    %v852 = vld [vmem:[%s3 + $0xc0] sm:$0xff]
    %v853 = vld [vmem:[%s3 + $0xc8] sm:$0xff]
    %v854 = vld [vmem:[%s3 + $0xd0] sm:$0xff]
    %v855 = vld [vmem:[%s3 + $0xd8] sm:$0xff]
    %v856 = vld [vmem:[%s3 + $0xe0] sm:$0xff]
    %v857 = vld [vmem:[%s3 + $0xe8] sm:$0xff]
    %v858 = vld [vmem:[%s3 + $0xf0] sm:$0xff]
    %v859 = vld [vmem:[%s3 + $0xf8] sm:$0xff]
    %v860 = vld [vmem:[#allocation3 + $0x1] sm:$0xff]
    %v861 = vld [vmem:[#allocation3 + $0x11] sm:$0xff]
    %s862 = scalar_lea.vmem %s3, 256
    %v863 = vld [vmem:[%s862] sm:$0xff]
    %v864 = vld [vmem:[%s862 + $0x8] sm:$0xff]
    %v865 = vld [vmem:[%s862 + $0x10] sm:$0xff]
    %v866 = vld [vmem:[%s862 + $0x18] sm:$0xff]
    %v867 = vld [vmem:[%s862 + $0x20] sm:$0xff]
    %v868 = vld [vmem:[%s862 + $0x28] sm:$0xff]
    %v869 = vld [vmem:[%s862 + $0x30] sm:$0xff]
    %v870 = vld [vmem:[%s862 + $0x38] sm:$0xff]
    %v871 = vld [vmem:[%s862 + $0x40] sm:$0xff]
    %v872 = vld [vmem:[%s862 + $0x48] sm:$0xff]
    %v873 = vld [vmem:[%s862 + $0x50] sm:$0xff]
    %v874 = vld [vmem:[%s862 + $0x58] sm:$0xff]
    %v875 = vld [vmem:[%s862 + $0x60] sm:$0xff]
    %v876 = vld [vmem:[%s862 + $0x68] sm:$0xff]
    %v877 = vld [vmem:[%s862 + $0x70] sm:$0xff]
    %v878 = vld [vmem:[%s862 + $0x78] sm:$0xff]
    %v879 = vld [vmem:[%s862 + $0x80] sm:$0xff]
    %v880 = vld [vmem:[%s862 + $0x88] sm:$0xff]
    %v881 = vld [vmem:[%s862 + $0x90] sm:$0xff]
    %v882 = vld [vmem:[%s862 + $0x98] sm:$0xff]
    %v883 = vld [vmem:[%s862 + $0xa0] sm:$0xff]
    %v884 = vld [vmem:[%s862 + $0xa8] sm:$0xff]
    %v885 = vld [vmem:[%s862 + $0xb0] sm:$0xff]
    %v886 = vld [vmem:[%s862 + $0xb8] sm:$0xff]
    %v887 = vld [vmem:[%s862 + $0xc0] sm:$0xff]
    %v888 = vld [vmem:[%s862 + $0xc8] sm:$0xff]
    %v889 = vld [vmem:[%s862 + $0xd0] sm:$0xff]
    %v890 = vld [vmem:[%s862 + $0xd8] sm:$0xff]
    %v891 = vld [vmem:[%s862 + $0xe0] sm:$0xff]
    %v892 = vld [vmem:[%s862 + $0xe8] sm:$0xff]
    %v893 = vld [vmem:[%s862 + $0xf0] sm:$0xff]
    %v894 = vld [vmem:[%s862 + $0xf8] sm:$0xff]
    %895 = vmatprep.subr.mxu0 %v864
    %896 = vmatpush1.msra.mxu0 %v863
    %897 = vmatprep.subr.mxu0 %v866
    %898 = vmatpush1.msra.mxu0 %v865
    %899 = vmatprep.subr.mxu0 %v868
    %900 = vmatpush1.msra.mxu0 %v867
    %901 = vmatprep.subr.mxu0 %v870
    %902 = vmatpush1.msra.mxu0 %v869
    %903 = vmatprep.subr.mxu0 %v872
    %904 = vmatpush1.msra.mxu0 %v871
    %905 = vmatprep.subr.mxu0 %v874
    %906 = vmatpush1.msra.mxu0 %v873
    %907 = vmatprep.subr.mxu0 %v876
    %908 = vmatpush1.msra.mxu0 %v875
    %909 = vmatprep.subr.mxu0 %v878
    %910 = vmatpush1.msra.mxu0 %v877
    %911 = vmatprep.subr.mxu0 %v880
    %912 = vmatpush1.msra.mxu0 %v879
    %913 = vmatprep.subr.mxu0 %v882
    %914 = vmatpush1.msra.mxu0 %v881
    %915 = vmatprep.subr.mxu0 %v884
    %916 = vmatpush1.msra.mxu0 %v883
    %917 = vmatprep.subr.mxu0 %v886
    %918 = vmatpush1.msra.mxu0 %v885
    %919 = vmatprep.subr.mxu0 %v888
    %920 = vmatpush1.msra.mxu0 %v887
    %921 = vmatprep.subr.mxu0 %v890
    %922 = vmatpush1.msra.mxu0 %v889
    %923 = vmatprep.subr.mxu0 %v892
    %924 = vmatpush1.msra.mxu0 %v891
    %925 = vmatprep.subr.mxu0 %v894
    %926 = vmatpush1.msra.mxu0 %v893
    %927 = vmatprep.subr.mxu0 0.0
    %928 = vmatpush1.msra.mxu0 0.0
    %929 = vmatprep.subr.mxu0 0.0
    %930 = vmatpush1.msra.mxu0 0.0
    %931 = vmatprep.subr.mxu0 0.0
    %932 = vmatpush1.msra.mxu0 0.0
    %933 = vmatprep.subr.mxu0 0.0
    %934 = vmatpush1.msra.mxu0 0.0
    %935 = vmatprep.subr.mxu0 0.0
    %936 = vmatpush1.msra.mxu0 0.0
    %937 = vmatprep.subr.mxu0 0.0
    %938 = vmatpush1.msra.mxu0 0.0
    %939 = vmatprep.subr.mxu0 0.0
    %940 = vmatpush1.msra.mxu0 0.0
    %941 = vmatprep.subr.mxu0 0.0
    %942 = vmatpush1.msra.mxu0 0.0
    %943 = vmatprep.subr.mxu0 0.0
    %944 = vmatpush1.msra.mxu0 0.0
    %945 = vmatprep.subr.mxu0 0.0
    %946 = vmatpush1.msra.mxu0 0.0
    %947 = vmatprep.subr.mxu0 0.0
    %948 = vmatpush1.msra.mxu0 0.0
    %949 = vmatprep.subr.mxu0 0.0
    %950 = vmatpush1.msra.mxu0 0.0
    %951 = vmatprep.subr.mxu0 0.0
    %952 = vmatpush1.msra.mxu0 0.0
    %953 = vmatprep.subr.mxu0 0.0
    %954 = vmatpush1.msra.mxu0 0.0
    %955 = vmatprep.subr.mxu0 0.0
    %956 = vmatpush1.msra.mxu0 0.0
    %957 = vmatprep.subr.mxu0 0.0
    %958 = vmatpush1.msra.mxu0 0.0
    %959 = vmatprep.mubr.f32.mxu0 0.0
    %960 = vmatmul.mubr.f32.gmra.mrb[0].mxu0 %v860
    %v961 = vpop.f32.mrb[0].mxu0
    %v962 = vadd.f32 0.0, %v961
    %v963 = vpop.f32.mrb[0].mxu0
    %v964 = vadd.f32 0.0, %v963
    %965 = vmatprep.mubr.f32.mxu0 0.0
    %966 = vmatmul.mubr.f32.gmra.mrb[0].mxu0 %v861
    %v967 = vpop.f32.mrb[0].mxu0
    %v968 = vadd.f32 0.0, %v967
    %v969 = vpop.f32.mrb[0].mxu0
    %v970 = vadd.f32 0.0, %v969
    %971 = vdwg.mxu0
    %972 = vmatprep.subr.mxu0 %v829
    %973 = vmatpush1.msra.mxu0 %v828
    %974 = vmatprep.subr.mxu0 %v831
    %975 = vmatpush1.msra.mxu0 %v830
    %976 = vmatprep.subr.mxu0 %v833
    %977 = vmatpush1.msra.mxu0 %v832
    %978 = vmatprep.subr.mxu0 %v835
    %979 = vmatpush1.msra.mxu0 %v834
    %980 = vmatprep.subr.mxu0 %v837
    %981 = vmatpush1.msra.mxu0 %v836
    %982 = vmatprep.subr.mxu0 %v839
    %983 = vmatpush1.msra.mxu0 %v838
    %984 = vmatprep.subr.mxu0 %v841
    %985 = vmatpush1.msra.mxu0 %v840
    %986 = vmatprep.subr.mxu0 %v843
    %987 = vmatpush1.msra.mxu0 %v842
    %988 = vmatprep.subr.mxu0 %v845
    %989 = vmatpush1.msra.mxu0 %v844
    %990 = vmatprep.subr.mxu0 %v847
    %991 = vmatpush1.msra.mxu0 %v846
    %992 = vmatprep.subr.mxu0 %v849
    %993 = vmatpush1.msra.mxu0 %v848
    %994 = vmatprep.subr.mxu0 %v851
    %995 = vmatpush1.msra.mxu0 %v850
    %996 = vmatprep.subr.mxu0 %v853
    %997 = vmatpush1.msra.mxu0 %v852
    %998 = vmatprep.subr.mxu0 %v855
    %999 = vmatpush1.msra.mxu0 %v854
    %1000 = vmatprep.subr.mxu0 %v857
    %1001 = vmatpush1.msra.mxu0 %v856
    %1002 = vmatprep.subr.mxu0 %v859
    %1003 = vmatpush1.msra.mxu0 %v858
    %1004 = vmatprep.subr.mxu0 0.0
    %1005 = vmatpush1.msra.mxu0 0.0
    %1006 = vmatprep.subr.mxu0 0.0
    %1007 = vmatpush1.msra.mxu0 0.0
    %1008 = vmatprep.subr.mxu0 0.0
    %1009 = vmatpush1.msra.mxu0 0.0
    %1010 = vmatprep.subr.mxu0 0.0
    %1011 = vmatpush1.msra.mxu0 0.0
    %1012 = vmatprep.subr.mxu0 0.0
    %1013 = vmatpush1.msra.mxu0 0.0
    %1014 = vmatprep.subr.mxu0 0.0
    %1015 = vmatpush1.msra.mxu0 0.0
    %1016 = vmatprep.subr.mxu0 0.0
    %1017 = vmatpush1.msra.mxu0 0.0
    %1018 = vmatprep.subr.mxu0 0.0
    %1019 = vmatpush1.msra.mxu0 0.0
    %1020 = vmatprep.subr.mxu0 0.0
    %1021 = vmatpush1.msra.mxu0 0.0
    %1022 = vmatprep.subr.mxu0 0.0
    %1023 = vmatpush1.msra.mxu0 0.0
    %1024 = vmatprep.subr.mxu0 0.0
    %1025 = vmatpush1.msra.mxu0 0.0
    %1026 = vmatprep.subr.mxu0 0.0
    %1027 = vmatpush1.msra.mxu0 0.0
    %1028 = vmatprep.subr.mxu0 0.0
    %1029 = vmatpush1.msra.mxu0 0.0
    %1030 = vmatprep.subr.mxu0 0.0
    %1031 = vmatpush1.msra.mxu0 0.0
    %1032 = vmatprep.subr.mxu0 0.0
    %1033 = vmatpush1.msra.mxu0 0.0
    %1034 = vmatprep.subr.mxu0 0.0
    %1035 = vmatpush1.msra.mxu0 0.0
    %1036 = vmatprep.mubr.f32.mxu0 0.0
    %1037 = vmatmul.mubr.f32.gmra.mrb[0].mxu0 %v826
    %v1038 = vpop.f32.mrb[0].mxu0
    %v1039 = vadd.f32 %v962, %v1038
    %v1040 = vpop.f32.mrb[0].mxu0
    %v1041 = vadd.f32 %v964, %v1040
    %1042 = vmatprep.mubr.f32.mxu0 0.0
    %1043 = vmatmul.mubr.f32.gmra.mrb[0].mxu0 %v827
    %v1044 = vpop.f32.mrb[0].mxu0
    %v1045 = vadd.f32 %v968, %v1044
    %v1046 = vpop.f32.mrb[0].mxu0
    %v1047 = vadd.f32 %v970, %v1046
    %1048 = vdwg.mxu0
    %v1049 = vld [vmem:[#allocation3 + $0x2] sm:$0xff]
    %v1050 = vld [vmem:[#allocation3 + $0x12] sm:$0xff]
    %s1051 = scalar_lea.vmem %s3, 512
    %v1052 = vld [vmem:[%s1051] sm:$0xff]
    %v1053 = vld [vmem:[%s1051 + $0x8] sm:$0xff]
    %v1054 = vld [vmem:[%s1051 + $0x10] sm:$0xff]
    %v1055 = vld [vmem:[%s1051 + $0x18] sm:$0xff]
    %v1056 = vld [vmem:[%s1051 + $0x20] sm:$0xff]
    %v1057 = vld [vmem:[%s1051 + $0x28] sm:$0xff]
    %v1058 = vld [vmem:[%s1051 + $0x30] sm:$0xff]
    %v1059 = vld [vmem:[%s1051 + $0x38] sm:$0xff]
    %v1060 = vld [vmem:[%s1051 + $0x40] sm:$0xff]
    %v1061 = vld [vmem:[%s1051 + $0x48] sm:$0xff]
    %v1062 = vld [vmem:[%s1051 + $0x50] sm:$0xff]
    %v1063 = vld [vmem:[%s1051 + $0x58] sm:$0xff]
    %v1064 = vld [vmem:[%s1051 + $0x60] sm:$0xff]
    %v1065 = vld [vmem:[%s1051 + $0x68] sm:$0xff]
    %v1066 = vld [vmem:[%s1051 + $0x70] sm:$0xff]
    %v1067 = vld [vmem:[%s1051 + $0x78] sm:$0xff]
    %v1068 = vld [vmem:[%s1051 + $0x80] sm:$0xff]
    %v1069 = vld [vmem:[%s1051 + $0x88] sm:$0xff]
    %v1070 = vld [vmem:[%s1051 + $0x90] sm:$0xff]
    %v1071 = vld [vmem:[%s1051 + $0x98] sm:$0xff]
    %v1072 = vld [vmem:[%s1051 + $0xa0] sm:$0xff]
    %v1073 = vld [vmem:[%s1051 + $0xa8] sm:$0xff]
    %v1074 = vld [vmem:[%s1051 + $0xb0] sm:$0xff]
    %v1075 = vld [vmem:[%s1051 + $0xb8] sm:$0xff]
    %v1076 = vld [vmem:[%s1051 + $0xc0] sm:$0xff]
    %v1077 = vld [vmem:[%s1051 + $0xc8] sm:$0xff]
    %v1078 = vld [vmem:[%s1051 + $0xd0] sm:$0xff]
    %v1079 = vld [vmem:[%s1051 + $0xd8] sm:$0xff]
    %v1080 = vld [vmem:[%s1051 + $0xe0] sm:$0xff]
    %v1081 = vld [vmem:[%s1051 + $0xe8] sm:$0xff]
    %v1082 = vld [vmem:[%s1051 + $0xf0] sm:$0xff]
    %v1083 = vld [vmem:[%s1051 + $0xf8] sm:$0xff]
    %1084 = vmatprep.subr.mxu0 %v1053
    %1085 = vmatpush1.msra.mxu0 %v1052
    %1086 = vmatprep.subr.mxu0 %v1055
    %1087 = vmatpush1.msra.mxu0 %v1054
    %1088 = vmatprep.subr.mxu0 %v1057
    %1089 = vmatpush1.msra.mxu0 %v1056
    %1090 = vmatprep.subr.mxu0 %v1059
    %1091 = vmatpush1.msra.mxu0 %v1058
    %1092 = vmatprep.subr.mxu0 %v1061
    %1093 = vmatpush1.msra.mxu0 %v1060
    %1094 = vmatprep.subr.mxu0 %v1063
    %1095 = vmatpush1.msra.mxu0 %v1062
    %1096 = vmatprep.subr.mxu0 %v1065
    %1097 = vmatpush1.msra.mxu0 %v1064
    %1098 = vmatprep.subr.mxu0 %v1067
    %1099 = vmatpush1.msra.mxu0 %v1066
    %1100 = vmatprep.subr.mxu0 %v1069
    %1101 = vmatpush1.msra.mxu0 %v1068
    %1102 = vmatprep.subr.mxu0 %v1071
    %1103 = vmatpush1.msra.mxu0 %v1070
    %1104 = vmatprep.subr.mxu0 %v1073
    %1105 = vmatpush1.msra.mxu0 %v1072
    %1106 = vmatprep.subr.mxu0 %v1075
    %1107 = vmatpush1.msra.mxu0 %v1074
    %1108 = vmatprep.subr.mxu0 %v1077
    %1109 = vmatpush1.msra.mxu0 %v1076
    %1110 = vmatprep.subr.mxu0 %v1079
    %1111 = vmatpush1.msra.mxu0 %v1078
    %1112 = vmatprep.subr.mxu0 %v1081
    %1113 = vmatpush1.msra.mxu0 %v1080
    %1114 = vmatprep.subr.mxu0 %v1083
    %1115 = vmatpush1.msra.mxu0 %v1082
    %1116 = vmatprep.subr.mxu0 0.0
    %1117 = vmatpush1.msra.mxu0 0.0
    %1118 = vmatprep.subr.mxu0 0.0
    %1119 = vmatpush1.msra.mxu0 0.0
    %1120 = vmatprep.subr.mxu0 0.0
    %1121 = vmatpush1.msra.mxu0 0.0
    %1122 = vmatprep.subr.mxu0 0.0
    %1123 = vmatpush1.msra.mxu0 0.0
    %1124 = vmatprep.subr.mxu0 0.0
    %1125 = vmatpush1.msra.mxu0 0.0
    %1126 = vmatprep.subr.mxu0 0.0
    %1127 = vmatpush1.msra.mxu0 0.0
    %1128 = vmatprep.subr.mxu0 0.0
    %1129 = vmatpush1.msra.mxu0 0.0
    %1130 = vmatprep.subr.mxu0 0.0
    %1131 = vmatpush1.msra.mxu0 0.0
    %1132 = vmatprep.subr.mxu0 0.0
    %1133 = vmatpush1.msra.mxu0 0.0
    %1134 = vmatprep.subr.mxu0 0.0
    %1135 = vmatpush1.msra.mxu0 0.0
    %1136 = vmatprep.subr.mxu0 0.0
    %1137 = vmatpush1.msra.mxu0 0.0
    %1138 = vmatprep.subr.mxu0 0.0
    %1139 = vmatpush1.msra.mxu0 0.0
    %1140 = vmatprep.subr.mxu0 0.0
    %1141 = vmatpush1.msra.mxu0 0.0
    %1142 = vmatprep.subr.mxu0 0.0
    %1143 = vmatpush1.msra.mxu0 0.0
    %1144 = vmatprep.subr.mxu0 0.0
    %1145 = vmatpush1.msra.mxu0 0.0
    %1146 = vmatprep.subr.mxu0 0.0
    %1147 = vmatpush1.msra.mxu0 0.0
    %1148 = vmatprep.mubr.f32.mxu0 0.0
    %1149 = vmatmul.mubr.f32.gmra.mrb[0].mxu0 %v1049
    %v1150 = vpop.f32.mrb[0].mxu0
    %v1151 = vadd.f32 0.0, %v1150
    %v1152 = vpop.f32.mrb[0].mxu0
    %v1153 = vadd.f32 0.0, %v1152
    %1154 = vmatprep.mubr.f32.mxu0 0.0
    %1155 = vmatmul.mubr.f32.gmra.mrb[0].mxu0 %v1050
    %v1156 = vpop.f32.mrb[0].mxu0
    %v1157 = vadd.f32 0.0, %v1156
    %v1158 = vpop.f32.mrb[0].mxu0
    %v1159 = vadd.f32 0.0, %v1158
    %1160 = vdwg.mxu0
    %v1161 = vadd.f32 %v1039, %v1151
    %v1162 = vadd.f32 %v1041, %v1153
    %v1163 = vadd.f32 %v1045, %v1157
    %v1164 = vadd.f32 %v1047, %v1159
    %v1165 = vld [vmem:[#allocation3 + $0x3] sm:$0xff]
    %v1166 = vld [vmem:[#allocation3 + $0x13] sm:$0xff]
    %s1167 = scalar_lea.vmem %s3, 768
    %v1168 = vld [vmem:[%s1167] sm:$0xff]
    %v1169 = vld [vmem:[%s1167 + $0x8] sm:$0xff]
    %v1170 = vld [vmem:[%s1167 + $0x10] sm:$0xff]
    %v1171 = vld [vmem:[%s1167 + $0x18] sm:$0xff]
    %v1172 = vld [vmem:[%s1167 + $0x20] sm:$0xff]
    %v1173 = vld [vmem:[%s1167 + $0x28] sm:$0xff]
    %v1174 = vld [vmem:[%s1167 + $0x30] sm:$0xff]
    %v1175 = vld [vmem:[%s1167 + $0x38] sm:$0xff]
    %v1176 = vld [vmem:[%s1167 + $0x40] sm:$0xff]
    %v1177 = vld [vmem:[%s1167 + $0x48] sm:$0xff]
    %v1178 = vld [vmem:[%s1167 + $0x50] sm:$0xff]
    %v1179 = vld [vmem:[%s1167 + $0x58] sm:$0xff]
    %v1180 = vld [vmem:[%s1167 + $0x60] sm:$0xff]
    %v1181 = vld [vmem:[%s1167 + $0x68] sm:$0xff]
    %v1182 = vld [vmem:[%s1167 + $0x70] sm:$0xff]
    %v1183 = vld [vmem:[%s1167 + $0x78] sm:$0xff]
    %v1184 = vld [vmem:[%s1167 + $0x80] sm:$0xff]
    %v1185 = vld [vmem:[%s1167 + $0x88] sm:$0xff]
    %v1186 = vld [vmem:[%s1167 + $0x90] sm:$0xff]
    %v1187 = vld [vmem:[%s1167 + $0x98] sm:$0xff]
    %v1188 = vld [vmem:[%s1167 + $0xa0] sm:$0xff]
    %v1189 = vld [vmem:[%s1167 + $0xa8] sm:$0xff]
    %v1190 = vld [vmem:[%s1167 + $0xb0] sm:$0xff]
    %v1191 = vld [vmem:[%s1167 + $0xb8] sm:$0xff]
    %v1192 = vld [vmem:[%s1167 + $0xc0] sm:$0xff]
    %v1193 = vld [vmem:[%s1167 + $0xc8] sm:$0xff]
    %v1194 = vld [vmem:[%s1167 + $0xd0] sm:$0xff]
    %v1195 = vld [vmem:[%s1167 + $0xd8] sm:$0xff]
    %v1196 = vld [vmem:[%s1167 + $0xe0] sm:$0xff]
    %v1197 = vld [vmem:[%s1167 + $0xe8] sm:$0xff]
    %v1198 = vld [vmem:[%s1167 + $0xf0] sm:$0xff]
    %v1199 = vld [vmem:[%s1167 + $0xf8] sm:$0xff]
    %1200 = vmatprep.subr.mxu0 %v1169
    %1201 = vmatpush1.msra.mxu0 %v1168
    %1202 = vmatprep.subr.mxu0 %v1171
    %1203 = vmatpush1.msra.mxu0 %v1170
    %1204 = vmatprep.subr.mxu0 %v1173
    %1205 = vmatpush1.msra.mxu0 %v1172
    %1206 = vmatprep.subr.mxu0 %v1175
    %1207 = vmatpush1.msra.mxu0 %v1174
    %1208 = vmatprep.subr.mxu0 %v1177
    %1209 = vmatpush1.msra.mxu0 %v1176
    %1210 = vmatprep.subr.mxu0 %v1179
    %1211 = vmatpush1.msra.mxu0 %v1178
    %1212 = vmatprep.subr.mxu0 %v1181
    %1213 = vmatpush1.msra.mxu0 %v1180
    %1214 = vmatprep.subr.mxu0 %v1183
    %1215 = vmatpush1.msra.mxu0 %v1182
    %1216 = vmatprep.subr.mxu0 %v1185
    %1217 = vmatpush1.msra.mxu0 %v1184
    %1218 = vmatprep.subr.mxu0 %v1187
    %1219 = vmatpush1.msra.mxu0 %v1186
    %1220 = vmatprep.subr.mxu0 %v1189
    %1221 = vmatpush1.msra.mxu0 %v1188
    %1222 = vmatprep.subr.mxu0 %v1191
    %1223 = vmatpush1.msra.mxu0 %v1190
    %1224 = vmatprep.subr.mxu0 %v1193
    %1225 = vmatpush1.msra.mxu0 %v1192
    %1226 = vmatprep.subr.mxu0 %v1195
    %1227 = vmatpush1.msra.mxu0 %v1194
    %1228 = vmatprep.subr.mxu0 %v1197
    %1229 = vmatpush1.msra.mxu0 %v1196
    %1230 = vmatprep.subr.mxu0 %v1199
    %1231 = vmatpush1.msra.mxu0 %v1198
    %1232 = vmatprep.subr.mxu0 0.0
    %1233 = vmatpush1.msra.mxu0 0.0
    %1234 = vmatprep.subr.mxu0 0.0
    %1235 = vmatpush1.msra.mxu0 0.0
    %1236 = vmatprep.subr.mxu0 0.0
    %1237 = vmatpush1.msra.mxu0 0.0
    %1238 = vmatprep.subr.mxu0 0.0
    %1239 = vmatpush1.msra.mxu0 0.0
    %1240 = vmatprep.subr.mxu0 0.0
    %1241 = vmatpush1.msra.mxu0 0.0
    %1242 = vmatprep.subr.mxu0 0.0
    %1243 = vmatpush1.msra.mxu0 0.0
    %1244 = vmatprep.subr.mxu0 0.0
    %1245 = vmatpush1.msra.mxu0 0.0
    %1246 = vmatprep.subr.mxu0 0.0
    %1247 = vmatpush1.msra.mxu0 0.0
    %1248 = vmatprep.subr.mxu0 0.0
    %1249 = vmatpush1.msra.mxu0 0.0
    %1250 = vmatprep.subr.mxu0 0.0
    %1251 = vmatpush1.msra.mxu0 0.0
    %1252 = vmatprep.subr.mxu0 0.0
    %1253 = vmatpush1.msra.mxu0 0.0
    %1254 = vmatprep.subr.mxu0 0.0
    %1255 = vmatpush1.msra.mxu0 0.0
    %1256 = vmatprep.subr.mxu0 0.0
    %1257 = vmatpush1.msra.mxu0 0.0
    %1258 = vmatprep.subr.mxu0 0.0
    %1259 = vmatpush1.msra.mxu0 0.0
    %1260 = vmatprep.subr.mxu0 0.0
    %1261 = vmatpush1.msra.mxu0 0.0
    %1262 = vmatprep.subr.mxu0 0.0
    %1263 = vmatpush1.msra.mxu0 0.0
    %1264 = vmatprep.mubr.f32.mxu0 0.0
    %1265 = vmatmul.mubr.f32.gmra.mrb[0].mxu0 %v1165
    %v1266 = vpop.f32.mrb[0].mxu0
    %v1267 = vadd.f32 0.0, %v1266
    %v1268 = vpop.f32.mrb[0].mxu0
    %v1269 = vadd.f32 0.0, %v1268
    %1270 = vmatprep.mubr.f32.mxu0 0.0
    %1271 = vmatmul.mubr.f32.gmra.mrb[0].mxu0 %v1166
    %v1272 = vpop.f32.mrb[0].mxu0
    %v1273 = vadd.f32 0.0, %v1272
    %v1274 = vpop.f32.mrb[0].mxu0
    %v1275 = vadd.f32 0.0, %v1274
    %1276 = vdwg.mxu0
    %v1277 = vadd.f32 %v1161, %v1267
    %v1278 = vadd.f32 %v1162, %v1269
    %v1279 = vadd.f32 %v1163, %v1273
    %v1280 = vadd.f32 %v1164, %v1275
    %v1281 = vld [vmem:[#allocation3 + $0x4] sm:$0xff]
    %v1282 = vld [vmem:[#allocation3 + $0x14] sm:$0xff]
    %s1283 = scalar_lea.vmem %s3, 1024
    %v1284 = vld [vmem:[%s1283] sm:$0xff]
    %v1285 = vld [vmem:[%s1283 + $0x8] sm:$0xff]
    %v1286 = vld [vmem:[%s1283 + $0x10] sm:$0xff]
    %v1287 = vld [vmem:[%s1283 + $0x18] sm:$0xff]
    %v1288 = vld [vmem:[%s1283 + $0x20] sm:$0xff]
    %v1289 = vld [vmem:[%s1283 + $0x28] sm:$0xff]
    %v1290 = vld [vmem:[%s1283 + $0x30] sm:$0xff]
    %v1291 = vld [vmem:[%s1283 + $0x38] sm:$0xff]
    %v1292 = vld [vmem:[%s1283 + $0x40] sm:$0xff]
    %v1293 = vld [vmem:[%s1283 + $0x48] sm:$0xff]
    %v1294 = vld [vmem:[%s1283 + $0x50] sm:$0xff]
    %v1295 = vld [vmem:[%s1283 + $0x58] sm:$0xff]
    %v1296 = vld [vmem:[%s1283 + $0x60] sm:$0xff]
    %v1297 = vld [vmem:[%s1283 + $0x68] sm:$0xff]
    %v1298 = vld [vmem:[%s1283 + $0x70] sm:$0xff]
    %v1299 = vld [vmem:[%s1283 + $0x78] sm:$0xff]
    %v1300 = vld [vmem:[%s1283 + $0x80] sm:$0xff]
    %v1301 = vld [vmem:[%s1283 + $0x88] sm:$0xff]
    %v1302 = vld [vmem:[%s1283 + $0x90] sm:$0xff]
    %v1303 = vld [vmem:[%s1283 + $0x98] sm:$0xff]
    %v1304 = vld [vmem:[%s1283 + $0xa0] sm:$0xff]
    %v1305 = vld [vmem:[%s1283 + $0xa8] sm:$0xff]
    %v1306 = vld [vmem:[%s1283 + $0xb0] sm:$0xff]
    %v1307 = vld [vmem:[%s1283 + $0xb8] sm:$0xff]
    %v1308 = vld [vmem:[%s1283 + $0xc0] sm:$0xff]
    %v1309 = vld [vmem:[%s1283 + $0xc8] sm:$0xff]
    %v1310 = vld [vmem:[%s1283 + $0xd0] sm:$0xff]
    %v1311 = vld [vmem:[%s1283 + $0xd8] sm:$0xff]
    %v1312 = vld [vmem:[%s1283 + $0xe0] sm:$0xff]
    %v1313 = vld [vmem:[%s1283 + $0xe8] sm:$0xff]
    %v1314 = vld [vmem:[%s1283 + $0xf0] sm:$0xff]
    %v1315 = vld [vmem:[%s1283 + $0xf8] sm:$0xff]
    %1316 = vmatprep.subr.mxu0 %v1285
    %1317 = vmatpush1.msra.mxu0 %v1284
    %1318 = vmatprep.subr.mxu0 %v1287
    %1319 = vmatpush1.msra.mxu0 %v1286
    %1320 = vmatprep.subr.mxu0 %v1289
    %1321 = vmatpush1.msra.mxu0 %v1288
    %1322 = vmatprep.subr.mxu0 %v1291
    %1323 = vmatpush1.msra.mxu0 %v1290
    %1324 = vmatprep.subr.mxu0 %v1293
    %1325 = vmatpush1.msra.mxu0 %v1292
    %1326 = vmatprep.subr.mxu0 %v1295
    %1327 = vmatpush1.msra.mxu0 %v1294
    %1328 = vmatprep.subr.mxu0 %v1297
    %1329 = vmatpush1.msra.mxu0 %v1296
    %1330 = vmatprep.subr.mxu0 %v1299
    %1331 = vmatpush1.msra.mxu0 %v1298
    %1332 = vmatprep.subr.mxu0 %v1301
    %1333 = vmatpush1.msra.mxu0 %v1300
    %1334 = vmatprep.subr.mxu0 %v1303
    %1335 = vmatpush1.msra.mxu0 %v1302
    %1336 = vmatprep.subr.mxu0 %v1305
    %1337 = vmatpush1.msra.mxu0 %v1304
    %1338 = vmatprep.subr.mxu0 %v1307
    %1339 = vmatpush1.msra.mxu0 %v1306
    %1340 = vmatprep.subr.mxu0 %v1309
    %1341 = vmatpush1.msra.mxu0 %v1308
    %1342 = vmatprep.subr.mxu0 %v1311
    %1343 = vmatpush1.msra.mxu0 %v1310
    %1344 = vmatprep.subr.mxu0 %v1313
    %1345 = vmatpush1.msra.mxu0 %v1312
    %1346 = vmatprep.subr.mxu0 %v1315
    %1347 = vmatpush1.msra.mxu0 %v1314
    %1348 = vmatprep.subr.mxu0 0.0
    %1349 = vmatpush1.msra.mxu0 0.0
    %1350 = vmatprep.subr.mxu0 0.0
    %1351 = vmatpush1.msra.mxu0 0.0
    %1352 = vmatprep.subr.mxu0 0.0
    %1353 = vmatpush1.msra.mxu0 0.0
    %1354 = vmatprep.subr.mxu0 0.0
    %1355 = vmatpush1.msra.mxu0 0.0
    %1356 = vmatprep.subr.mxu0 0.0
    %1357 = vmatpush1.msra.mxu0 0.0
    %1358 = vmatprep.subr.mxu0 0.0
    %1359 = vmatpush1.msra.mxu0 0.0
    %1360 = vmatprep.subr.mxu0 0.0
    %1361 = vmatpush1.msra.mxu0 0.0
    %1362 = vmatprep.subr.mxu0 0.0
    %1363 = vmatpush1.msra.mxu0 0.0
    %1364 = vmatprep.subr.mxu0 0.0
    %1365 = vmatpush1.msra.mxu0 0.0
    %1366 = vmatprep.subr.mxu0 0.0
    %1367 = vmatpush1.msra.mxu0 0.0
    %1368 = vmatprep.subr.mxu0 0.0
    %1369 = vmatpush1.msra.mxu0 0.0
    %1370 = vmatprep.subr.mxu0 0.0
    %1371 = vmatpush1.msra.mxu0 0.0
    %1372 = vmatprep.subr.mxu0 0.0
    %1373 = vmatpush1.msra.mxu0 0.0
    %1374 = vmatprep.subr.mxu0 0.0
    %1375 = vmatpush1.msra.mxu0 0.0
    %1376 = vmatprep.subr.mxu0 0.0
    %1377 = vmatpush1.msra.mxu0 0.0
    %1378 = vmatprep.subr.mxu0 0.0
    %1379 = vmatpush1.msra.mxu0 0.0
    %1380 = vmatprep.mubr.f32.mxu0 0.0
    %1381 = vmatmul.mubr.f32.gmra.mrb[0].mxu0 %v1281
    %v1382 = vpop.f32.mrb[0].mxu0
    %v1383 = vadd.f32 0.0, %v1382
    %v1384 = vpop.f32.mrb[0].mxu0
    %v1385 = vadd.f32 0.0, %v1384
    %1386 = vmatprep.mubr.f32.mxu0 0.0
    %1387 = vmatmul.mubr.f32.gmra.mrb[0].mxu0 %v1282
    %v1388 = vpop.f32.mrb[0].mxu0
    %v1389 = vadd.f32 0.0, %v1388
    %v1390 = vpop.f32.mrb[0].mxu0
    %v1391 = vadd.f32 0.0, %v1390
    %1392 = vdwg.mxu0
    %v1393 = vadd.f32 %v1277, %v1383
    %v1394 = vadd.f32 %v1278, %v1385
    %v1395 = vadd.f32 %v1279, %v1389
    %v1396 = vadd.f32 %v1280, %v1391
    %v1397 = vmax.f32 %v1393, %v1394
    %v1398 = vmax.f32 %v1395, %v1396
    %1399 = vst [vmem:[#allocation4] sm:$0xff] %v1397
    %1400 = vst [vmem:[#allocation4 + $0x8] sm:$0xff] %v1398
    %v1401 = vld [vmem:[#allocation4] ss:$2 sm:$0xf]
    %s1402 = scalar_lea.vmem [#allocation4], 8
    %v1403 = vld [vmem:[%s1402] ss:$2 sm:$0xf]
    %s1404 = scalar_lea.vmem [#allocation4], 1
    %v1405 = vld [vmem:[%s1404] ss:$2 sm:$0xf]
    %s1406 = scalar_lea.vmem [#allocation4], 9
    %v1407 = vld [vmem:[%s1406] ss:$2 sm:$0xf]
    %v1408 = vmax.f32 %v1401, %v1405
    %v1409 = vmax.f32 %v1403, %v1407
    %v1410 = vld [vmem:[%s4] sm:$0x1]
    %v1412 = vlaneseq
    %v1413 = vshrl.u32 %v1412, 7
    %v1414 = vsub.s32 0, %v1413
    %v1415 = vrot.slane %v1410, %v1414
    %v1417 = vadd.f32 %v1408, %v1415
    %v1418 = vadd.f32 %v1409, %v1415
    %v1419 = vmax.f32 %v1417, 0.0
    %v1420 = vmax.f32 %v1418, 0.0
    %1421 = vst [vmem:[#allocation5] sm:$0xf] %v1419
    %1422 = vst [vmem:[#allocation5 + $0x4] sm:$0xf] %v1420
    %v1423 = vld [vmem:[#allocation5] sm:$0x1]
    %v1424 = vld [vmem:[#allocation5 + $0x4] sm:$0x1]
    %v1425 = vld [vmem:[%s5] sm:$0xff]
    %v1426 = vld [vmem:[%s5 + $0x8] sm:$0xff]
    %v1427 = vld [vmem:[%s5 + $0x10] sm:$0xff]
    %v1428 = vld [vmem:[%s5 + $0x18] sm:$0xff]
    %v1429 = vld [vmem:[%s5 + $0x20] sm:$0xff]
    %v1430 = vld [vmem:[%s5 + $0x28] sm:$0xff]
    %v1431 = vld [vmem:[%s5 + $0x30] sm:$0xff]
    %v1432 = vld [vmem:[%s5 + $0x38] sm:$0xff]
    %v1433 = vld [vmem:[%s5 + $0x40] sm:$0xff]
    %v1434 = vld [vmem:[%s5 + $0x48] sm:$0xff]
    %v1435 = vld [vmem:[%s5 + $0x50] sm:$0xff]
    %v1436 = vld [vmem:[%s5 + $0x58] sm:$0xff]
    %v1437 = vld [vmem:[%s5 + $0x60] sm:$0xff]
    %v1438 = vld [vmem:[%s5 + $0x68] sm:$0xff]
    %v1439 = vld [vmem:[%s5 + $0x70] sm:$0xff]
    %v1440 = vld [vmem:[%s5 + $0x78] sm:$0xff]
    %v1441 = vld [vmem:[#allocation5 + $0x1] sm:$0x1]
    %v1442 = vld [vmem:[#allocation5 + $0x5] sm:$0x1]
    %s1443 = scalar_lea.vmem %s5, 128
    %v1444 = vld [vmem:[%s1443] sm:$0xff]
    %v1445 = vld [vmem:[%s1443 + $0x8] sm:$0xff]
    %v1446 = vld [vmem:[%s1443 + $0x10] sm:$0xff]
    %v1447 = vld [vmem:[%s1443 + $0x18] sm:$0xff]
    %v1448 = vld [vmem:[%s1443 + $0x20] sm:$0xff]
    %v1449 = vld [vmem:[%s1443 + $0x28] sm:$0xff]
    %v1450 = vld [vmem:[%s1443 + $0x30] sm:$0xff]
    %v1451 = vld [vmem:[%s1443 + $0x38] sm:$0xff]
    %v1452 = vld [vmem:[%s1443 + $0x40] sm:$0xff]
    %v1453 = vld [vmem:[%s1443 + $0x48] sm:$0xff]
    %v1454 = vld [vmem:[%s1443 + $0x50] sm:$0xff]
    %v1455 = vld [vmem:[%s1443 + $0x58] sm:$0xff]
    %v1456 = vld [vmem:[%s1443 + $0x60] sm:$0xff]
    %v1457 = vld [vmem:[%s1443 + $0x68] sm:$0xff]
    %v1458 = vld [vmem:[%s1443 + $0x70] sm:$0xff]
    %v1459 = vld [vmem:[%s1443 + $0x78] sm:$0xff]
    %v1462 = vrot.slane %v1442, 7
    %vm1463 = vcmask 1041409
    %v1464 = vsel %vm1463, %v1462, %v1441
    %1466 = vmatprep.subr.mxu0 0.0
    %1467 = vmatpush1.msra.mxu0 %v1444
    %1468 = vmatprep.subr.mxu0 0.0
    %1469 = vmatpush1.msra.mxu0 %v1445
    %1470 = vmatprep.subr.mxu0 0.0
    %1471 = vmatpush1.msra.mxu0 %v1446
    %1472 = vmatprep.subr.mxu0 0.0
    %1473 = vmatpush1.msra.mxu0 %v1447
    %1474 = vmatprep.subr.mxu0 0.0
    %1475 = vmatpush1.msra.mxu0 %v1448
    %1476 = vmatprep.subr.mxu0 0.0
    %1477 = vmatpush1.msra.mxu0 %v1449
    %1478 = vmatprep.subr.mxu0 0.0
    %1479 = vmatpush1.msra.mxu0 %v1450
    %1480 = vmatprep.subr.mxu0 0.0
    %1481 = vmatpush1.msra.mxu0 %v1451
    %1482 = vmatprep.subr.mxu0 0.0
    %1483 = vmatpush1.msra.mxu0 %v1452
    %1484 = vmatprep.subr.mxu0 0.0
    %1485 = vmatpush1.msra.mxu0 %v1453
    %1486 = vmatprep.subr.mxu0 0.0
    %1487 = vmatpush1.msra.mxu0 %v1454
    %1488 = vmatprep.subr.mxu0 0.0
    %1489 = vmatpush1.msra.mxu0 %v1455
    %1490 = vmatprep.subr.mxu0 0.0
    %1491 = vmatpush1.msra.mxu0 %v1456
    %1492 = vmatprep.subr.mxu0 0.0
    %1493 = vmatpush1.msra.mxu0 %v1457
    %1494 = vmatprep.subr.mxu0 0.0
    %1495 = vmatpush1.msra.mxu0 %v1458
    %1496 = vmatprep.subr.mxu0 0.0
    %1497 = vmatpush1.msra.mxu0 %v1459
    %1498 = vmatprep.subr.mxu0 0.0
    %1499 = vmatpush1.msra.mxu0 0.0
    %1500 = vmatprep.subr.mxu0 0.0
    %1501 = vmatpush1.msra.mxu0 0.0
    %1502 = vmatprep.subr.mxu0 0.0
    %1503 = vmatpush1.msra.mxu0 0.0
    %1504 = vmatprep.subr.mxu0 0.0
    %1505 = vmatpush1.msra.mxu0 0.0
    %1506 = vmatprep.subr.mxu0 0.0
    %1507 = vmatpush1.msra.mxu0 0.0
    %1508 = vmatprep.subr.mxu0 0.0
    %1509 = vmatpush1.msra.mxu0 0.0
    %1510 = vmatprep.subr.mxu0 0.0
    %1511 = vmatpush1.msra.mxu0 0.0
    %1512 = vmatprep.subr.mxu0 0.0
    %1513 = vmatpush1.msra.mxu0 0.0
    %1514 = vmatprep.subr.mxu0 0.0
    %1515 = vmatpush1.msra.mxu0 0.0
    %1516 = vmatprep.subr.mxu0 0.0
    %1517 = vmatpush1.msra.mxu0 0.0
    %1518 = vmatprep.subr.mxu0 0.0
    %1519 = vmatpush1.msra.mxu0 0.0
    %1520 = vmatprep.subr.mxu0 0.0
    %1521 = vmatpush1.msra.mxu0 0.0
    %1522 = vmatprep.subr.mxu0 0.0
    %1523 = vmatpush1.msra.mxu0 0.0
    %1524 = vmatprep.subr.mxu0 0.0
    %1525 = vmatpush1.msra.mxu0 0.0
    %1526 = vmatprep.subr.mxu0 0.0
    %1527 = vmatpush1.msra.mxu0 0.0
    %1528 = vmatprep.subr.mxu0 0.0
    %1529 = vmatpush1.msra.mxu0 0.0
    %1530 = vmatprep.mubr.f32.mxu0 0.0
    %1531 = vmatmul.mubr.f32.gmra.mrb[0].mxu0 %v1464
    %v1532 = vpop.f32.mrb[0].mxu0
    %v1533 = vadd.f32 0.0, %v1532
    %v1534 = vpop.f32.mrb[0].mxu0
    %1535 = vdwg.mxu0
    %v1538 = vrot.slane %v1424, 7
    %v1539 = vsel %vm1463, %v1538, %v1423
    %1541 = vmatprep.subr.mxu0 0.0
    %1542 = vmatpush1.msra.mxu0 %v1425
    %1543 = vmatprep.subr.mxu0 0.0
    %1544 = vmatpush1.msra.mxu0 %v1426
    %1545 = vmatprep.subr.mxu0 0.0
    %1546 = vmatpush1.msra.mxu0 %v1427
    %1547 = vmatprep.subr.mxu0 0.0
    %1548 = vmatpush1.msra.mxu0 %v1428
    %1549 = vmatprep.subr.mxu0 0.0
    %1550 = vmatpush1.msra.mxu0 %v1429
    %1551 = vmatprep.subr.mxu0 0.0
    %1552 = vmatpush1.msra.mxu0 %v1430
    %1553 = vmatprep.subr.mxu0 0.0
    %1554 = vmatpush1.msra.mxu0 %v1431
    %1555 = vmatprep.subr.mxu0 0.0
    %1556 = vmatpush1.msra.mxu0 %v1432
    %1557 = vmatprep.subr.mxu0 0.0
    %1558 = vmatpush1.msra.mxu0 %v1433
    %1559 = vmatprep.subr.mxu0 0.0
    %1560 = vmatpush1.msra.mxu0 %v1434
    %1561 = vmatprep.subr.mxu0 0.0
    %1562 = vmatpush1.msra.mxu0 %v1435
    %1563 = vmatprep.subr.mxu0 0.0
    %1564 = vmatpush1.msra.mxu0 %v1436
    %1565 = vmatprep.subr.mxu0 0.0
    %1566 = vmatpush1.msra.mxu0 %v1437
    %1567 = vmatprep.subr.mxu0 0.0
    %1568 = vmatpush1.msra.mxu0 %v1438
    %1569 = vmatprep.subr.mxu0 0.0
    %1570 = vmatpush1.msra.mxu0 %v1439
    %1571 = vmatprep.subr.mxu0 0.0
    %1572 = vmatpush1.msra.mxu0 %v1440
    %1573 = vmatprep.subr.mxu0 0.0
    %1574 = vmatpush1.msra.mxu0 0.0
    %1575 = vmatprep.subr.mxu0 0.0
    %1576 = vmatpush1.msra.mxu0 0.0
    %1577 = vmatprep.subr.mxu0 0.0
    %1578 = vmatpush1.msra.mxu0 0.0
    %1579 = vmatprep.subr.mxu0 0.0
    %1580 = vmatpush1.msra.mxu0 0.0
    %1581 = vmatprep.subr.mxu0 0.0
    %1582 = vmatpush1.msra.mxu0 0.0
    %1583 = vmatprep.subr.mxu0 0.0
    %1584 = vmatpush1.msra.mxu0 0.0
    %1585 = vmatprep.subr.mxu0 0.0
    %1586 = vmatpush1.msra.mxu0 0.0
    %1587 = vmatprep.subr.mxu0 0.0
    %1588 = vmatpush1.msra.mxu0 0.0
    %1589 = vmatprep.subr.mxu0 0.0
    %1590 = vmatpush1.msra.mxu0 0.0
    %1591 = vmatprep.subr.mxu0 0.0
    %1592 = vmatpush1.msra.mxu0 0.0
    %1593 = vmatprep.subr.mxu0 0.0
    %1594 = vmatpush1.msra.mxu0 0.0
    %1595 = vmatprep.subr.mxu0 0.0
    %1596 = vmatpush1.msra.mxu0 0.0
    %1597 = vmatprep.subr.mxu0 0.0
    %1598 = vmatpush1.msra.mxu0 0.0
    %1599 = vmatprep.subr.mxu0 0.0
    %1600 = vmatpush1.msra.mxu0 0.0
    %1601 = vmatprep.subr.mxu0 0.0
    %1602 = vmatpush1.msra.mxu0 0.0
    %1603 = vmatprep.subr.mxu0 0.0
    %1604 = vmatpush1.msra.mxu0 0.0
    %1605 = vmatprep.mubr.f32.mxu0 0.0
    %1606 = vmatmul.mubr.f32.gmra.mrb[0].mxu0 %v1539
    %v1607 = vpop.f32.mrb[0].mxu0
    %v1608 = vadd.f32 %v1533, %v1607
    %v1609 = vpop.f32.mrb[0].mxu0
    %1610 = vdwg.mxu0
    %v1611 = vld [vmem:[#allocation5 + $0x2] sm:$0x1]
    %v1612 = vld [vmem:[#allocation5 + $0x6] sm:$0x1]
    %s1613 = scalar_lea.vmem %s5, 256
    %v1614 = vld [vmem:[%s1613] sm:$0xff]
    %v1615 = vld [vmem:[%s1613 + $0x8] sm:$0xff]
    %v1616 = vld [vmem:[%s1613 + $0x10] sm:$0xff]
    %v1617 = vld [vmem:[%s1613 + $0x18] sm:$0xff]
    %v1618 = vld [vmem:[%s1613 + $0x20] sm:$0xff]
    %v1619 = vld [vmem:[%s1613 + $0x28] sm:$0xff]
    %v1620 = vld [vmem:[%s1613 + $0x30] sm:$0xff]
    %v1621 = vld [vmem:[%s1613 + $0x38] sm:$0xff]
    %v1622 = vld [vmem:[%s1613 + $0x40] sm:$0xff]
    %v1623 = vld [vmem:[%s1613 + $0x48] sm:$0xff]
    %v1624 = vld [vmem:[%s1613 + $0x50] sm:$0xff]
    %v1625 = vld [vmem:[%s1613 + $0x58] sm:$0xff]
    %v1626 = vld [vmem:[%s1613 + $0x60] sm:$0xff]
    %v1627 = vld [vmem:[%s1613 + $0x68] sm:$0xff]
    %v1628 = vld [vmem:[%s1613 + $0x70] sm:$0xff]
    %v1629 = vld [vmem:[%s1613 + $0x78] sm:$0xff]
    %v1632 = vrot.slane %v1612, 7
    %v1633 = vsel %vm1463, %v1632, %v1611
    %1635 = vmatprep.subr.mxu0 0.0
    %1636 = vmatpush1.msra.mxu0 %v1614
    %1637 = vmatprep.subr.mxu0 0.0
    %1638 = vmatpush1.msra.mxu0 %v1615
    %1639 = vmatprep.subr.mxu0 0.0
    %1640 = vmatpush1.msra.mxu0 %v1616
    %1641 = vmatprep.subr.mxu0 0.0
    %1642 = vmatpush1.msra.mxu0 %v1617
    %1643 = vmatprep.subr.mxu0 0.0
    %1644 = vmatpush1.msra.mxu0 %v1618
    %1645 = vmatprep.subr.mxu0 0.0
    %1646 = vmatpush1.msra.mxu0 %v1619
    %1647 = vmatprep.subr.mxu0 0.0
    %1648 = vmatpush1.msra.mxu0 %v1620
    %1649 = vmatprep.subr.mxu0 0.0
    %1650 = vmatpush1.msra.mxu0 %v1621
    %1651 = vmatprep.subr.mxu0 0.0
    %1652 = vmatpush1.msra.mxu0 %v1622
    %1653 = vmatprep.subr.mxu0 0.0
    %1654 = vmatpush1.msra.mxu0 %v1623
    %1655 = vmatprep.subr.mxu0 0.0
    %1656 = vmatpush1.msra.mxu0 %v1624
    %1657 = vmatprep.subr.mxu0 0.0
    %1658 = vmatpush1.msra.mxu0 %v1625
    %1659 = vmatprep.subr.mxu0 0.0
    %1660 = vmatpush1.msra.mxu0 %v1626
    %1661 = vmatprep.subr.mxu0 0.0
    %1662 = vmatpush1.msra.mxu0 %v1627
    %1663 = vmatprep.subr.mxu0 0.0
    %1664 = vmatpush1.msra.mxu0 %v1628
    %1665 = vmatprep.subr.mxu0 0.0
    %1666 = vmatpush1.msra.mxu0 %v1629
    %1667 = vmatprep.subr.mxu0 0.0
    %1668 = vmatpush1.msra.mxu0 0.0
    %1669 = vmatprep.subr.mxu0 0.0
    %1670 = vmatpush1.msra.mxu0 0.0
    %1671 = vmatprep.subr.mxu0 0.0
    %1672 = vmatpush1.msra.mxu0 0.0
    %1673 = vmatprep.subr.mxu0 0.0
    %1674 = vmatpush1.msra.mxu0 0.0
    %1675 = vmatprep.subr.mxu0 0.0
    %1676 = vmatpush1.msra.mxu0 0.0
    %1677 = vmatprep.subr.mxu0 0.0
    %1678 = vmatpush1.msra.mxu0 0.0
    %1679 = vmatprep.subr.mxu0 0.0
    %1680 = vmatpush1.msra.mxu0 0.0
    %1681 = vmatprep.subr.mxu0 0.0
    %1682 = vmatpush1.msra.mxu0 0.0
    %1683 = vmatprep.subr.mxu0 0.0
    %1684 = vmatpush1.msra.mxu0 0.0
    %1685 = vmatprep.subr.mxu0 0.0
    %1686 = vmatpush1.msra.mxu0 0.0
    %1687 = vmatprep.subr.mxu0 0.0
    %1688 = vmatpush1.msra.mxu0 0.0
    %1689 = vmatprep.subr.mxu0 0.0
    %1690 = vmatpush1.msra.mxu0 0.0
    %1691 = vmatprep.subr.mxu0 0.0
    %1692 = vmatpush1.msra.mxu0 0.0
    %1693 = vmatprep.subr.mxu0 0.0
    %1694 = vmatpush1.msra.mxu0 0.0
    %1695 = vmatprep.subr.mxu0 0.0
    %1696 = vmatpush1.msra.mxu0 0.0
    %1697 = vmatprep.subr.mxu0 0.0
    %1698 = vmatpush1.msra.mxu0 0.0
    %1699 = vmatprep.mubr.f32.mxu0 0.0
    %1700 = vmatmul.mubr.f32.gmra.mrb[0].mxu0 %v1633
    %v1701 = vpop.f32.mrb[0].mxu0
    %v1702 = vadd.f32 0.0, %v1701
    %v1703 = vpop.f32.mrb[0].mxu0
    %1704 = vdwg.mxu0
    %v1705 = vadd.f32 %v1608, %v1702
    %v1706 = vld [vmem:[#allocation5 + $0x3] sm:$0x1]
    %v1707 = vld [vmem:[#allocation5 + $0x7] sm:$0x1]
    %s1708 = scalar_lea.vmem %s5, 384
    %v1709 = vld [vmem:[%s1708] sm:$0xff]
    %v1710 = vld [vmem:[%s1708 + $0x8] sm:$0xff]
    %v1711 = vld [vmem:[%s1708 + $0x10] sm:$0xff]
    %v1712 = vld [vmem:[%s1708 + $0x18] sm:$0xff]
    %v1713 = vld [vmem:[%s1708 + $0x20] sm:$0xff]
    %v1714 = vld [vmem:[%s1708 + $0x28] sm:$0xff]
    %v1715 = vld [vmem:[%s1708 + $0x30] sm:$0xff]
    %v1716 = vld [vmem:[%s1708 + $0x38] sm:$0xff]
    %v1717 = vld [vmem:[%s1708 + $0x40] sm:$0xff]
    %v1718 = vld [vmem:[%s1708 + $0x48] sm:$0xff]
    %v1719 = vld [vmem:[%s1708 + $0x50] sm:$0xff]
    %v1720 = vld [vmem:[%s1708 + $0x58] sm:$0xff]
    %v1721 = vld [vmem:[%s1708 + $0x60] sm:$0xff]
    %v1722 = vld [vmem:[%s1708 + $0x68] sm:$0xff]
    %v1723 = vld [vmem:[%s1708 + $0x70] sm:$0xff]
    %v1724 = vld [vmem:[%s1708 + $0x78] sm:$0xff]
    %v1727 = vrot.slane %v1707, 7
    %v1728 = vsel %vm1463, %v1727, %v1706
    %1730 = vmatprep.subr.mxu0 0.0
    %1731 = vmatpush1.msra.mxu0 %v1709
    %1732 = vmatprep.subr.mxu0 0.0
    %1733 = vmatpush1.msra.mxu0 %v1710
    %1734 = vmatprep.subr.mxu0 0.0
    %1735 = vmatpush1.msra.mxu0 %v1711
    %1736 = vmatprep.subr.mxu0 0.0
    %1737 = vmatpush1.msra.mxu0 %v1712
    %1738 = vmatprep.subr.mxu0 0.0
    %1739 = vmatpush1.msra.mxu0 %v1713
    %1740 = vmatprep.subr.mxu0 0.0
    %1741 = vmatpush1.msra.mxu0 %v1714
    %1742 = vmatprep.subr.mxu0 0.0
    %1743 = vmatpush1.msra.mxu0 %v1715
    %1744 = vmatprep.subr.mxu0 0.0
    %1745 = vmatpush1.msra.mxu0 %v1716
    %1746 = vmatprep.subr.mxu0 0.0
    %1747 = vmatpush1.msra.mxu0 %v1717
    %1748 = vmatprep.subr.mxu0 0.0
    %1749 = vmatpush1.msra.mxu0 %v1718
    %1750 = vmatprep.subr.mxu0 0.0
    %1751 = vmatpush1.msra.mxu0 %v1719
    %1752 = vmatprep.subr.mxu0 0.0
    %1753 = vmatpush1.msra.mxu0 %v1720
    %1754 = vmatprep.subr.mxu0 0.0
    %1755 = vmatpush1.msra.mxu0 %v1721
    %1756 = vmatprep.subr.mxu0 0.0
    %1757 = vmatpush1.msra.mxu0 %v1722
    %1758 = vmatprep.subr.mxu0 0.0
    %1759 = vmatpush1.msra.mxu0 %v1723
    %1760 = vmatprep.subr.mxu0 0.0
    %1761 = vmatpush1.msra.mxu0 %v1724
    %1762 = vmatprep.subr.mxu0 0.0
    %1763 = vmatpush1.msra.mxu0 0.0
    %1764 = vmatprep.subr.mxu0 0.0
    %1765 = vmatpush1.msra.mxu0 0.0
    %1766 = vmatprep.subr.mxu0 0.0
    %1767 = vmatpush1.msra.mxu0 0.0
    %1768 = vmatprep.subr.mxu0 0.0
    %1769 = vmatpush1.msra.mxu0 0.0
    %1770 = vmatprep.subr.mxu0 0.0
    %1771 = vmatpush1.msra.mxu0 0.0
    %1772 = vmatprep.subr.mxu0 0.0
    %1773 = vmatpush1.msra.mxu0 0.0
    %1774 = vmatprep.subr.mxu0 0.0
    %1775 = vmatpush1.msra.mxu0 0.0
    %1776 = vmatprep.subr.mxu0 0.0
    %1777 = vmatpush1.msra.mxu0 0.0
    %1778 = vmatprep.subr.mxu0 0.0
    %1779 = vmatpush1.msra.mxu0 0.0
    %1780 = vmatprep.subr.mxu0 0.0
    %1781 = vmatpush1.msra.mxu0 0.0
    %1782 = vmatprep.subr.mxu0 0.0
    %1783 = vmatpush1.msra.mxu0 0.0
    %1784 = vmatprep.subr.mxu0 0.0
    %1785 = vmatpush1.msra.mxu0 0.0
    %1786 = vmatprep.subr.mxu0 0.0
    %1787 = vmatpush1.msra.mxu0 0.0
    %1788 = vmatprep.subr.mxu0 0.0
    %1789 = vmatpush1.msra.mxu0 0.0
    %1790 = vmatprep.subr.mxu0 0.0
    %1791 = vmatpush1.msra.mxu0 0.0
    %1792 = vmatprep.subr.mxu0 0.0
    %1793 = vmatpush1.msra.mxu0 0.0
    %1794 = vmatprep.mubr.f32.mxu0 0.0
    %1795 = vmatmul.mubr.f32.gmra.mrb[0].mxu0 %v1728
    %v1796 = vpop.f32.mrb[0].mxu0
    %v1797 = vadd.f32 0.0, %v1796
    %v1798 = vpop.f32.mrb[0].mxu0
    %1799 = vdwg.mxu0
    %v1800 = vadd.f32 %v1705, %v1797
    %v1801 = vld [vmem:[%s6] sm:$0x1]
    %v1803 = vlaneseq
    %v1804 = vshrl.u32 %v1803, 7
    %v1805 = vsub.s32 0, %v1804
    %v1806 = vrot.slane %v1801, %v1805
    %v1808 = vadd.f32 %v1800, %v1806
    %v1809 = vmax.f32 %v1808, 0.0
    %v1810 = vld [vmem:[%s7] sm:$0xff]
    %v1811 = vld [vmem:[%s7 + $0x8] sm:$0xff]
    %v1812 = vld [vmem:[%s7 + $0x10] sm:$0xff]
    %v1813 = vld [vmem:[%s7 + $0x18] sm:$0xff]
    %v1814 = vld [vmem:[%s7 + $0x20] sm:$0xff]
    %v1815 = vld [vmem:[%s7 + $0x28] sm:$0xff]
    %v1816 = vld [vmem:[%s7 + $0x30] sm:$0xff]
    %v1817 = vld [vmem:[%s7 + $0x38] sm:$0xff]
    %v1818 = vld [vmem:[%s7 + $0x40] sm:$0xff]
    %v1819 = vld [vmem:[%s7 + $0x48] sm:$0xff]
    %v1820 = vld [vmem:[%s7 + $0x50] sm:$0xff]
    %v1821 = vld [vmem:[%s7 + $0x58] sm:$0xff]
    %v1822 = vld [vmem:[%s7 + $0x60] sm:$0xff]
    %v1823 = vld [vmem:[%s7 + $0x68] sm:$0xff]
    %v1824 = vld [vmem:[%s7 + $0x70] sm:$0xff]
    %v1825 = vld [vmem:[%s7 + $0x78] sm:$0xff]
    %v1826 = vld [vmem:[%s8] sm:$0x1]
    %v1828 = vlaneseq
    %v1829 = vshrl.u32 %v1828, 7
    %v1830 = vsub.s32 0, %v1829
    %v1831 = vrot.slane %v1826, %v1830
    %1833 = vmatprep.subr.mxu0 0.0
    %1834 = vmatpush1.msra.mxu0 %v1810
    %1835 = vmatprep.subr.mxu0 0.0
    %1836 = vmatpush1.msra.mxu0 %v1811
    %1837 = vmatprep.subr.mxu0 0.0
    %1838 = vmatpush1.msra.mxu0 %v1812
    %1839 = vmatprep.subr.mxu0 0.0
    %1840 = vmatpush1.msra.mxu0 %v1813
    %1841 = vmatprep.subr.mxu0 0.0
    %1842 = vmatpush1.msra.mxu0 %v1814
    %1843 = vmatprep.subr.mxu0 0.0
    %1844 = vmatpush1.msra.mxu0 %v1815
    %1845 = vmatprep.subr.mxu0 0.0
    %1846 = vmatpush1.msra.mxu0 %v1816
    %1847 = vmatprep.subr.mxu0 0.0
    %1848 = vmatpush1.msra.mxu0 %v1817
    %1849 = vmatprep.subr.mxu0 0.0
    %1850 = vmatpush1.msra.mxu0 %v1818
    %1851 = vmatprep.subr.mxu0 0.0
    %1852 = vmatpush1.msra.mxu0 %v1819
    %1853 = vmatprep.subr.mxu0 0.0
    %1854 = vmatpush1.msra.mxu0 %v1820
    %1855 = vmatprep.subr.mxu0 0.0
    %1856 = vmatpush1.msra.mxu0 %v1821
    %1857 = vmatprep.subr.mxu0 0.0
    %1858 = vmatpush1.msra.mxu0 %v1822
    %1859 = vmatprep.subr.mxu0 0.0
    %1860 = vmatpush1.msra.mxu0 %v1823
    %1861 = vmatprep.subr.mxu0 0.0
    %1862 = vmatpush1.msra.mxu0 %v1824
    %1863 = vmatprep.subr.mxu0 0.0
    %1864 = vmatpush1.msra.mxu0 %v1825
    %1865 = vmatprep.subr.mxu0 0.0
    %1866 = vmatpush1.msra.mxu0 0.0
    %1867 = vmatprep.subr.mxu0 0.0
    %1868 = vmatpush1.msra.mxu0 0.0
    %1869 = vmatprep.subr.mxu0 0.0
    %1870 = vmatpush1.msra.mxu0 0.0
    %1871 = vmatprep.subr.mxu0 0.0
    %1872 = vmatpush1.msra.mxu0 0.0
    %1873 = vmatprep.subr.mxu0 0.0
    %1874 = vmatpush1.msra.mxu0 0.0
    %1875 = vmatprep.subr.mxu0 0.0
    %1876 = vmatpush1.msra.mxu0 0.0
    %1877 = vmatprep.subr.mxu0 0.0
    %1878 = vmatpush1.msra.mxu0 0.0
    %1879 = vmatprep.subr.mxu0 0.0
    %1880 = vmatpush1.msra.mxu0 0.0
    %1881 = vmatprep.subr.mxu0 0.0
    %1882 = vmatpush1.msra.mxu0 0.0
    %1883 = vmatprep.subr.mxu0 0.0
    %1884 = vmatpush1.msra.mxu0 0.0
    %1885 = vmatprep.subr.mxu0 0.0
    %1886 = vmatpush1.msra.mxu0 0.0
    %1887 = vmatprep.subr.mxu0 0.0
    %1888 = vmatpush1.msra.mxu0 0.0
    %1889 = vmatprep.subr.mxu0 0.0
    %1890 = vmatpush1.msra.mxu0 0.0
    %1891 = vmatprep.subr.mxu0 0.0
    %1892 = vmatpush1.msra.mxu0 0.0
    %1893 = vmatprep.subr.mxu0 0.0
    %1894 = vmatpush1.msra.mxu0 0.0
    %1895 = vmatprep.subr.mxu0 0.0
    %1896 = vmatpush1.msra.mxu0 0.0
    %1897 = vmatprep.mubr.f32.mxu0 0.0
    %1898 = vmatmul.mubr.f32.gmra.mrb[0].mxu0 %v1809
    %v1899 = vpop.f32.mrb[0].mxu0
    %v1900 = vadd.f32 %v1831, %v1899
    %v1901 = vpop.f32.mrb[0].mxu0
    %1902 = vdwg.mxu0
    %v1903 = vmax.f32 %v1900, 0.0
    %v1904 = vld [vmem:[%s9] sm:$0xff]
    %v1905 = vld [vmem:[%s9 + $0x8] sm:$0xff]
    %v1906 = vld [vmem:[%s9 + $0x10] sm:$0xff]
    %v1907 = vld [vmem:[%s9 + $0x18] sm:$0xff]
    %v1908 = vld [vmem:[%s9 + $0x20] sm:$0xff]
    %v1909 = vld [vmem:[%s9 + $0x28] sm:$0xff]
    %v1910 = vld [vmem:[%s9 + $0x30] sm:$0xff]
    %v1911 = vld [vmem:[%s9 + $0x38] sm:$0xff]
    %v1912 = vld [vmem:[%s9 + $0x40] sm:$0xff]
    %v1913 = vld [vmem:[%s9 + $0x48] sm:$0xff]
    %v1914 = vld [vmem:[%s9 + $0x50] sm:$0xff]
    %v1915 = vld [vmem:[%s9 + $0x58] sm:$0xff]
    %v1916 = vld [vmem:[%s9 + $0x60] sm:$0xff]
    %v1917 = vld [vmem:[%s9 + $0x68] sm:$0xff]
    %v1918 = vld [vmem:[%s9 + $0x70] sm:$0xff]
    %v1919 = vld [vmem:[%s9 + $0x78] sm:$0xff]
    %v1920 = vld [vmem:[%s10] sm:$0x1]
    %v1922 = vlaneseq
    %v1923 = vshrl.u32 %v1922, 7
    %v1924 = vsub.s32 0, %v1923
    %v1925 = vrot.slane %v1920, %v1924
    %1927 = vmatprep.subr.mxu0 0.0
    %1928 = vmatpush1.msra.mxu0 %v1904
    %1929 = vmatprep.subr.mxu0 0.0
    %1930 = vmatpush1.msra.mxu0 %v1905
    %1931 = vmatprep.subr.mxu0 0.0
    %1932 = vmatpush1.msra.mxu0 %v1906
    %1933 = vmatprep.subr.mxu0 0.0
    %1934 = vmatpush1.msra.mxu0 %v1907
    %1935 = vmatprep.subr.mxu0 0.0
    %1936 = vmatpush1.msra.mxu0 %v1908
    %1937 = vmatprep.subr.mxu0 0.0
    %1938 = vmatpush1.msra.mxu0 %v1909
    %1939 = vmatprep.subr.mxu0 0.0
    %1940 = vmatpush1.msra.mxu0 %v1910
    %1941 = vmatprep.subr.mxu0 0.0
    %1942 = vmatpush1.msra.mxu0 %v1911
    %1943 = vmatprep.subr.mxu0 0.0
    %1944 = vmatpush1.msra.mxu0 %v1912
    %1945 = vmatprep.subr.mxu0 0.0
    %1946 = vmatpush1.msra.mxu0 %v1913
    %1947 = vmatprep.subr.mxu0 0.0
    %1948 = vmatpush1.msra.mxu0 %v1914
    %1949 = vmatprep.subr.mxu0 0.0
    %1950 = vmatpush1.msra.mxu0 %v1915
    %1951 = vmatprep.subr.mxu0 0.0
    %1952 = vmatpush1.msra.mxu0 %v1916
    %1953 = vmatprep.subr.mxu0 0.0
    %1954 = vmatpush1.msra.mxu0 %v1917
    %1955 = vmatprep.subr.mxu0 0.0
    %1956 = vmatpush1.msra.mxu0 %v1918
    %1957 = vmatprep.subr.mxu0 0.0
    %1958 = vmatpush1.msra.mxu0 %v1919
    %1959 = vmatprep.subr.mxu0 0.0
    %1960 = vmatpush1.msra.mxu0 0.0
    %1961 = vmatprep.subr.mxu0 0.0
    %1962 = vmatpush1.msra.mxu0 0.0
    %1963 = vmatprep.subr.mxu0 0.0
    %1964 = vmatpush1.msra.mxu0 0.0
    %1965 = vmatprep.subr.mxu0 0.0
    %1966 = vmatpush1.msra.mxu0 0.0
    %1967 = vmatprep.subr.mxu0 0.0
    %1968 = vmatpush1.msra.mxu0 0.0
    %1969 = vmatprep.subr.mxu0 0.0
    %1970 = vmatpush1.msra.mxu0 0.0
    %1971 = vmatprep.subr.mxu0 0.0
    %1972 = vmatpush1.msra.mxu0 0.0
    %1973 = vmatprep.subr.mxu0 0.0
    %1974 = vmatpush1.msra.mxu0 0.0
    %1975 = vmatprep.subr.mxu0 0.0
    %1976 = vmatpush1.msra.mxu0 0.0
    %1977 = vmatprep.subr.mxu0 0.0
    %1978 = vmatpush1.msra.mxu0 0.0
    %1979 = vmatprep.subr.mxu0 0.0
    %1980 = vmatpush1.msra.mxu0 0.0
    %1981 = vmatprep.subr.mxu0 0.0
    %1982 = vmatpush1.msra.mxu0 0.0
    %1983 = vmatprep.subr.mxu0 0.0
    %1984 = vmatpush1.msra.mxu0 0.0
    %1985 = vmatprep.subr.mxu0 0.0
    %1986 = vmatpush1.msra.mxu0 0.0
    %1987 = vmatprep.subr.mxu0 0.0
    %1988 = vmatpush1.msra.mxu0 0.0
    %1989 = vmatprep.subr.mxu0 0.0
    %1990 = vmatpush1.msra.mxu0 0.0
    %1991 = vmatprep.mubr.f32.mxu0 0.0
    %1992 = vmatmul.mubr.f32.gmra.mrb[0].mxu0 %v1903
    %v1993 = vpop.f32.mrb[0].mxu0
    %v1994 = vadd.f32 %v1925, %v1993
    %v1995 = vpop.f32.mrb[0].mxu0
    %1996 = vdwg.mxu0
    %1997 = vst [vmem:[#allocation6] sm:$0x3] %v1994
    // Predicated region
    $region46: #{mnist_cnn_forward.1} parent=1 // pred_check
      _
    $region47: #{mnist_cnn_forward.1} parent=1 // pred_check_branch
      %1999 = sbr.rel (0) target = $region49
    $region48: #{mnist_cnn_forward.1} parent=1 // pred_region
      %s2001 = ssub.s32 32, 32
      %2002 = vsyncadd [#allocation7], %s2001
      %s2004 = sshll.u32 [#allocation6], 4
      %s2005 = int_to_ptr.vmem [resolvable:$true] %s2004
      %2007 = dma.vmem_to_hbm [thread:$0]  %s2005, 32, %s11, [#allocation7]
    $region49: #{mnist_cnn_forward.1} parent=1 // pred_fallthru
      _
    // Predicated region
    $region50: #{mnist_cnn_forward.1} parent=1 // pred_check
      _
    $region51: #{mnist_cnn_forward.1} parent=1 // pred_check_branch
      %2009 = sbr.rel (0) target = $region53
    $region52: #{mnist_cnn_forward.1} parent=1 // pred_region
      %2010 = dma.done [#allocation7], 32
    $region53: #{mnist_cnn_forward.1} parent=1 // pred_fallthru
      _
    %2011 = vsyncpa [#allocation7], 1

</llo_original>
